<compile_context>
chip_gen: v5e
topology: v5e:2x2
jax: 0.10.0
libtpu: 0.0.40
codegen_flags: <defaults>
</compile_context>

<pallas_src>
import functools

import jax
import jax.numpy as jnp
from jax.experimental import pallas as pl
from jax.experimental.pallas import tpu as pltpu

HIDDEN = 64       # hidden_dim
N_CONV = 3        # n_conv
N_GROUPS = 8      # ConvBlock._n_groups
GN_EPS = 1e-5     # nn.GroupNorm default eps


def _same_conv(x, wcat, bias, d, masks, seq):
    """'same'-padded k=3 dilated conv on one sample, taps packed along K.

    x: (T, C) f32; wcat: (3C, C) bf16 with row blocks [W_{t-d}; W_t; W_{t+d}];
    bias: (1, C) f32; masks: dict d -> (mask_lo, mask_hi) bool (T, C).
    """
    T, C = x.shape
    xb = x.astype(jnp.bfloat16)
    if d < seq:
        mask_lo, mask_hi = masks[d]
        # Shifted taps built on the input (linear, so masking inputs == masking
        # outputs); rolls are XLU work that overlaps the MXU.
        x_m = jnp.where(mask_lo, pltpu.roll(x, d, axis=0), 0.0).astype(jnp.bfloat16)
        x_p = jnp.where(mask_hi, pltpu.roll(x, T - d, axis=0), 0.0).astype(jnp.bfloat16)
        x_taps = jnp.concatenate([x_m, xb, x_p], axis=1)                  # (T, 3C) bf16
        y = jnp.dot(x_taps, wcat, preferred_element_type=jnp.float32)     # K=3C MXU push
    else:
        # Both shifted taps fall entirely inside the zero padding.
        y = jnp.dot(xb, wcat[C:2 * C, :], preferred_element_type=jnp.float32)
    return y + bias


def _group_norm(h, gmat, gamma, beta, inv_n):
    """GroupNorm on one sample: stats over (T, C/G) per contiguous-channel group.

    Sublane (T) reduce, then one tiny exact 0/1 (1,C)@(C,C) matmul that both
    reduces over the group's channels and broadcasts the stat back per lane.
    """
    csum = jnp.sum(h, axis=0, keepdims=True)              # (1, C)
    csumsq = jnp.sum(h * h, axis=0, keepdims=True)        # (1, C)
    mean = jnp.dot(csum, gmat, preferred_element_type=jnp.float32) * inv_n     # (1, C)
    meansq = jnp.dot(csumsq, gmat, preferred_element_type=jnp.float32) * inv_n
    var = jnp.maximum(meansq - mean * mean, 0.0)           # clamp one-pass variance
    rstd = jax.lax.rsqrt(var + GN_EPS)
    return (h - mean) * rstd * gamma + beta


def _conv_block_kernel(x_ref, w1_ref, b1_ref, gamma_ref, beta_ref,
                       w2_ref, b2_ref, gmat_ref, o_ref, *, dilations, groups):
    T, C = x_ref.shape
    inv_n = 1.0 / float(T * (C // groups))
    gmat = gmat_ref[...]                                   # (C, C) same-group indicator

    # Time index + per-dilation padding masks, hoisted once (d=1 reused by the
    # second conv of every layer).
    t_idx = jax.lax.broadcasted_iota(jnp.int32, (T, C), 0)
    masks = {}
    for d in sorted({1, *dilations}):
        if d < T:
            masks[d] = (t_idx >= d, t_idx < T - d)

    x = x_ref[...]                                         # (T, C) f32, resident across layers

    for li, d in enumerate(dilations):                     # all n_conv layers fused
        h = _same_conv(x, w1_ref[li], b1_ref[li], d, masks, T)
        h = jnp.maximum(h, 0.0)                            # ReLU (activ='relu')
        h = _group_norm(h, gmat, gamma_ref[li], beta_ref[li], inv_n)
        # Dropout(p=0) == identity.
        y = _same_conv(h, w2_ref[li], b2_ref[li], 1, masks, T)
        y = jnp.maximum(y, 0.0)
        x = y + x                                          # residual add
    o_ref[...] = x


def conv_block(x, params, n_groups=N_GROUPS):
    """ConvBlock.forward. x: (B, T, C) channel-last f32."""
    B, T, C = x.shape
    n_conv = params["w1"].shape[0]
    dilations = tuple(3 ** i for i in range(n_conv))

    # Exact 0/1 same-group indicator (groups are contiguous runs of C/G channels).
    ch = jnp.arange(C, dtype=jnp.int32) // (C // n_groups)
    gmat = (ch[:, None] == ch[None, :]).astype(jnp.float32)               # (C, C)

    kernel = functools.partial(_conv_block_kernel, dilations=dilations,
                               groups=n_groups)

    cost = pl.CostEstimate(
        # two k=3 convs (K=3C matmul) + two (1,C)@(C,C) GN matmuls per layer/sample
        flops=n_conv * B * (2 * 2 * T * 3 * C * C + 2 * 2 * C * C),
        transcendentals=n_conv * B * C,                    # rsqrt lanes per layer/sample
        bytes_accessed=8 * B * T * C                        # x in + out (f32)
        + n_conv * (2 * 2 * 3 * C * C + 6 * 4 * C)          # bf16 weights + f32 vectors
        + 4 * C * C)                                        # gmat

    full = lambda a: pl.BlockSpec(a.shape, lambda b, _nd=a.ndim: (0,) * _nd)
    sample = pl.BlockSpec((None, T, C), lambda b: (b, 0, 0))

    out = pl.pallas_call(
        kernel,
        out_shape=jax.ShapeDtypeStruct((B, T, C), jnp.float32),
        grid=(B,),
        in_specs=[sample,
                  full(params["w1"]), full(params["b1"]),
                  full(params["gamma"]), full(params["beta"]),
                  full(params["w2"]), full(params["b2"]),
                  full(gmat)],
        out_specs=sample,
        compiler_params=pltpu.CompilerParams(
            dimension_semantics=("parallel",)),
        cost_estimate=cost,
    )(x, params["w1"], params["b1"], params["gamma"], params["beta"],
      params["w2"], params["b2"], gmat)
    return out


def init_params(key, hidden, n_conv):
    """Deterministic init matching ConvBlock.__init__ shapes.

    Conv weights: xavier_uniform with gain('linear')=1, generated as
    (tap, C_in, C_out) and packed TAP-MAJOR ALONG THE CONTRACTION DIM into a
    (3*C_in, C_out) bf16 matrix (one K=3C MXU push per conv).  Conv bias: torch
    Conv1d default uniform(+-1/sqrt(fan_in)).  GroupNorm: weight=1, bias=0.
    """
    fan = hidden * 3                              # fan_in = fan_out = C * kernel_size
    w_bound = (6.0 / (fan + fan)) ** 0.5
    b_bound = 1.0 / (fan ** 0.5)
    w1s, b1s, gs, bes, w2s, b2s = [], [], [], [], [], []
    for i in range(n_conv):
        keys = jax.random.split(jax.random.fold_in(key, i), 4)
        w1 = jax.random.uniform(keys[0], (3, hidden, hidden), jnp.float32, -w_bound, w_bound)
        w2 = jax.random.uniform(keys[2], (3, hidden, hidden), jnp.float32, -w_bound, w_bound)
        w1s.append(w1.reshape(3 * hidden, hidden).astype(jnp.bfloat16))   # (3C, C)
        w2s.append(w2.reshape(3 * hidden, hidden).astype(jnp.bfloat16))
        b1s.append(jax.random.uniform(keys[1], (1, hidden), jnp.float32, -b_bound, b_bound))
        b2s.append(jax.random.uniform(keys[3], (1, hidden), jnp.float32, -b_bound, b_bound))
        gs.append(jnp.ones((1, hidden), jnp.float32))
        bes.append(jnp.zeros((1, hidden), jnp.float32))
    return dict(w1=jnp.stack(w1s), b1=jnp.stack(b1s), gamma=jnp.stack(gs),
                beta=jnp.stack(bes), w2=jnp.stack(w2s), b2=jnp.stack(b2s))


# ----------------------- pure-JAX reference (for checking) -----------------------

def _ref_same_conv(x, wcat, b, d):
    """x: (B, T, C) f32; wcat: (3C, C) bf16 row-packed taps (same as kernel)."""
    B, T, C = x.shape
    xb = x.astype(jnp.bfloat16)
    out = jnp.zeros((B, T, C), jnp.float32)
    for k in range(3):
        wk = wcat[k * C:(k + 1) * C, :]
        if k == 0:
            xs = jnp.pad(xb, ((0, 0), (d, 0), (0, 0)))[:, :T, :]     # x[t - d]
        elif k == 1:
            xs = xb
        else:
            xs = jnp.pad(xb, ((0, 0), (0, d), (0, 0)))[:, d:, :]     # x[t + d]
        out = out + jnp.einsum('btc,co->bto', xs, wk,
                               preferred_element_type=jnp.float32)
    return out + b


def _ref_group_norm(h, gamma, beta, groups):
    B, T, C = h.shape
    hg = h.reshape(B, T, groups, C // groups)
    mean = jnp.mean(hg, axis=(1, 3), keepdims=True)
    var = jnp.mean(jnp.square(hg - mean), axis=(1, 3), keepdims=True)
    hn = ((hg - mean) * jax.lax.rsqrt(var + GN_EPS)).reshape(B, T, C)
    return hn * gamma + beta


def _ref_conv_block(x, params, n_groups=N_GROUPS):
    n_conv = params["w1"].shape[0]
    for i in range(n_conv):
        d = 3 ** i
        h = _ref_same_conv(x, params["w1"][i], params["b1"][i], d)
        h = jnp.maximum(h, 0.0)
        h = _ref_group_norm(h, params["gamma"][i], params["beta"][i], n_groups)
        y = _ref_same_conv(h, params["w2"][i], params["b2"][i], 1)
        y = jnp.maximum(y, 0.0)
        x = y + x
    return x


if __name__ == "__main__":
    B, T = 2, 32
    key = jax.random.PRNGKey(0)
    kx, kp = jax.random.split(key)

    # PyTorch ConvBlock input layout is (B, hidden_dim, T); kernel is channel-last.
    x_nct = jax.random.normal(kx, (B, HIDDEN, T), jnp.float32)
    x = jnp.transpose(x_nct, (0, 2, 1))                       # (B, T, C)

    params = init_params(kp, HIDDEN, N_CONV)

    out = jax.block_until_ready(conv_block(x, params))
    assert out.shape == (B, T, HIDDEN)

    ref = _ref_conv_block(x, params)
    err = float(jnp.max(jnp.abs(out - ref)))
    if not err < 1e-2:
        raise AssertionError(f"kernel/reference mismatch: max abs err = {err}")
    print("KERNEL_OK")
</pallas_src>

<mosaic_0001>
module attributes {stable_mosaic.version = 11 : i64} {
  func.func @_conv_block_kernel(%arg0: i32, %arg1: memref<1x32x64xf32, #tpu.memory_space<vmem>>, %arg2: memref<3x192x64xbf16, #tpu.memory_space<vmem>>, %arg3: memref<3x1x64xf32, #tpu.memory_space<vmem>>, %arg4: memref<3x1x64xf32, #tpu.memory_space<vmem>>, %arg5: memref<3x1x64xf32, #tpu.memory_space<vmem>>, %arg6: memref<3x192x64xbf16, #tpu.memory_space<vmem>>, %arg7: memref<3x1x64xf32, #tpu.memory_space<vmem>>, %arg8: memref<64x64xf32, #tpu.memory_space<vmem>>, %arg9: memref<1x32x64xf32, #tpu.memory_space<vmem>>) attributes {dimension_semantics = [#tpu.dimension_semantics<parallel>], iteration_bounds = array<i64: 2>, scalar_prefetch = 0 : i64, scratch_operands = 0 : i64, tpu.core_type = #tpu.core_type<tc>, window_params = [{transform_indices = @transform_0, window_bounds = array<i64: 1, 32, 64>}, {pipeline_mode = #tpu.pipeline_mode<synchronous>, transform_indices = @transform_1, window_bounds = array<i64: 3, 192, 64>}, {pipeline_mode = #tpu.pipeline_mode<synchronous>, transform_indices = @transform_2, window_bounds = array<i64: 3, 1, 64>}, {pipeline_mode = #tpu.pipeline_mode<synchronous>, transform_indices = @transform_3, window_bounds = array<i64: 3, 1, 64>}, {pipeline_mode = #tpu.pipeline_mode<synchronous>, transform_indices = @transform_4, window_bounds = array<i64: 3, 1, 64>}, {pipeline_mode = #tpu.pipeline_mode<synchronous>, transform_indices = @transform_5, window_bounds = array<i64: 3, 192, 64>}, {pipeline_mode = #tpu.pipeline_mode<synchronous>, transform_indices = @transform_6, window_bounds = array<i64: 3, 1, 64>}, {pipeline_mode = #tpu.pipeline_mode<synchronous>, transform_indices = @transform_7, window_bounds = array<i64: 64, 64>}, {transform_indices = @transform_8, window_bounds = array<i64: 1, 32, 64>}]} {
    %c0 = arith.constant 0 : index
    %c0_0 = arith.constant 0 : index
    %0 = vector.load %arg8[%c0, %c0_0] : memref<64x64xf32, #tpu.memory_space<vmem>>, vector<64x64xf32>
    %1 = tpu.iota {dimensions = array<i32: 0>} : vector<32x64xi32>
    %c1_i32 = arith.constant 1 : i32
    %2 = vector.broadcast %c1_i32 : i32 to vector<32x64xi32>
    %3 = arith.cmpi sge, %1, %2 : vector<32x64xi32>
    %c31_i32 = arith.constant 31 : i32
    %4 = vector.broadcast %c31_i32 : i32 to vector<32x64xi32>
    %5 = arith.cmpi slt, %1, %4 : vector<32x64xi32>
    %c3_i32 = arith.constant 3 : i32
    %6 = vector.broadcast %c3_i32 : i32 to vector<32x64xi32>
    %7 = arith.cmpi sge, %1, %6 : vector<32x64xi32>
    %c29_i32 = arith.constant 29 : i32
    %8 = vector.broadcast %c29_i32 : i32 to vector<32x64xi32>
    %9 = arith.cmpi slt, %1, %8 : vector<32x64xi32>
    %c9_i32 = arith.constant 9 : i32
    %10 = vector.broadcast %c9_i32 : i32 to vector<32x64xi32>
    %11 = arith.cmpi sge, %1, %10 : vector<32x64xi32>
    %c23_i32 = arith.constant 23 : i32
    %12 = vector.broadcast %c23_i32 : i32 to vector<32x64xi32>
    %13 = arith.cmpi slt, %1, %12 : vector<32x64xi32>
    %c0_1 = arith.constant 0 : index
    %c0_2 = arith.constant 0 : index
    %c0_3 = arith.constant 0 : index
    %14 = vector.load %arg1[%c0_1, %c0_2, %c0_3] : memref<1x32x64xf32, #tpu.memory_space<vmem>>, vector<1x32x64xf32>
    %15 = vector.shape_cast %14 : vector<1x32x64xf32> to vector<32x64xf32>
    %c0_4 = arith.constant 0 : index
    %c0_5 = arith.constant 0 : index
    %c0_6 = arith.constant 0 : index
    %16 = vector.load %arg2[%c0_4, %c0_5, %c0_6] : memref<3x192x64xbf16, #tpu.memory_space<vmem>>, vector<1x192x64xbf16>
    %17 = vector.shape_cast %16 : vector<1x192x64xbf16> to vector<192x64xbf16>
    %c0_7 = arith.constant 0 : index
    %c0_8 = arith.constant 0 : index
    %c0_9 = arith.constant 0 : index
    %18 = vector.load %arg3[%c0_7, %c0_8, %c0_9] : memref<3x1x64xf32, #tpu.memory_space<vmem>>, vector<1x1x64xf32>
    %19 = vector.shape_cast %18 : vector<1x1x64xf32> to vector<1x64xf32>
    %20 = arith.truncf %15 : vector<32x64xf32> to vector<32x64xbf16>
    %c1_i32_10 = arith.constant 1 : i32
    %21 = tpu.dynamic_rotate %15 by %c1_i32_10 dim 0 : vector<32x64xf32>, i32 -> vector<32x64xf32>
    %cst = arith.constant 0.000000e+00 : f32
    %22 = vector.broadcast %cst : f32 to vector<32x64xf32>
    %23 = arith.select %3, %21, %22 : vector<32x64xi1>, vector<32x64xf32>
    %24 = arith.truncf %23 : vector<32x64xf32> to vector<32x64xbf16>
    %c31_i32_11 = arith.constant 31 : i32
    %25 = tpu.dynamic_rotate %15 by %c31_i32_11 dim 0 : vector<32x64xf32>, i32 -> vector<32x64xf32>
    %cst_12 = arith.constant 0.000000e+00 : f32
    %26 = vector.broadcast %cst_12 : f32 to vector<32x64xf32>
    %27 = arith.select %5, %25, %26 : vector<32x64xi1>, vector<32x64xf32>
    %28 = arith.truncf %27 : vector<32x64xf32> to vector<32x64xbf16>
    %29 = tpu.concatenate %24, %20, %28 in 1 : vector<32x64xbf16>, vector<32x64xbf16>, vector<32x64xbf16> -> vector<32x192xbf16>
    %cst_13 = arith.constant dense<0.000000e+00> : vector<32x64xf32>
    %30 = tpu.matmul %29, %17, %cst_13 {dimension_numbers = #tpu.dot_dimension_numbers<[1], [0], [0], [1], [0, 0, 1, 1], [], []>} : vector<32x192xbf16>, vector<192x64xbf16>, vector<32x64xf32> -> vector<32x64xf32>
    %31 = vector.broadcast %19 : vector<1x64xf32> to vector<32x64xf32>
    %32 = arith.addf %30, %31 : vector<32x64xf32>
    %cst_14 = arith.constant 0.000000e+00 : f32
    %33 = vector.broadcast %cst_14 : f32 to vector<32x64xf32>
    %34 = arith.maximumf %32, %33 : vector<32x64xf32>
    %c0_15 = arith.constant 0 : index
    %c0_16 = arith.constant 0 : index
    %c0_17 = arith.constant 0 : index
    %35 = vector.load %arg4[%c0_15, %c0_16, %c0_17] : memref<3x1x64xf32, #tpu.memory_space<vmem>>, vector<1x1x64xf32>
    %36 = vector.shape_cast %35 : vector<1x1x64xf32> to vector<1x64xf32>
    %c0_18 = arith.constant 0 : index
    %c0_19 = arith.constant 0 : index
    %c0_20 = arith.constant 0 : index
    %37 = vector.load %arg5[%c0_18, %c0_19, %c0_20] : memref<3x1x64xf32, #tpu.memory_space<vmem>>, vector<1x1x64xf32>
    %38 = vector.shape_cast %37 : vector<1x1x64xf32> to vector<1x64xf32>
    %cst_21 = arith.constant dense<0.000000e+00> : vector<64xf32>
    %39 = vector.multi_reduction <add>, %34, %cst_21 [0] : vector<32x64xf32> to vector<64xf32>
    %40 = vector.shape_cast %39 : vector<64xf32> to vector<1x64xf32>
    %41 = arith.mulf %34, %34 : vector<32x64xf32>
    %cst_22 = arith.constant dense<0.000000e+00> : vector<64xf32>
    %42 = vector.multi_reduction <add>, %41, %cst_22 [0] : vector<32x64xf32> to vector<64xf32>
    %43 = vector.shape_cast %42 : vector<64xf32> to vector<1x64xf32>
    %cst_23 = arith.constant dense<0.000000e+00> : vector<1x64xf32>
    %44 = tpu.matmul %40, %0, %cst_23 {dimension_numbers = #tpu.dot_dimension_numbers<[1], [0], [0], [1], [0, 0, 1, 1], [], []>} : vector<1x64xf32>, vector<64x64xf32>, vector<1x64xf32> -> vector<1x64xf32>
    %cst_24 = arith.constant 3.906250e-03 : f32
    %45 = vector.broadcast %cst_24 : f32 to vector<1x64xf32>
    %46 = arith.mulf %44, %45 : vector<1x64xf32>
    %cst_25 = arith.constant dense<0.000000e+00> : vector<1x64xf32>
    %47 = tpu.matmul %43, %0, %cst_25 {dimension_numbers = #tpu.dot_dimension_numbers<[1], [0], [0], [1], [0, 0, 1, 1], [], []>} : vector<1x64xf32>, vector<64x64xf32>, vector<1x64xf32> -> vector<1x64xf32>
    %cst_26 = arith.constant 3.906250e-03 : f32
    %48 = vector.broadcast %cst_26 : f32 to vector<1x64xf32>
    %49 = arith.mulf %47, %48 : vector<1x64xf32>
    %50 = arith.mulf %46, %46 : vector<1x64xf32>
    %51 = arith.subf %49, %50 : vector<1x64xf32>
    %cst_27 = arith.constant 0.000000e+00 : f32
    %52 = vector.broadcast %cst_27 : f32 to vector<1x64xf32>
    %53 = arith.maximumf %51, %52 : vector<1x64xf32>
    %cst_28 = arith.constant 9.99999974E-6 : f32
    %54 = vector.broadcast %cst_28 : f32 to vector<1x64xf32>
    %55 = arith.addf %53, %54 : vector<1x64xf32>
    %56 = math.rsqrt %55 : vector<1x64xf32>
    %57 = vector.broadcast %46 : vector<1x64xf32> to vector<32x64xf32>
    %58 = arith.subf %34, %57 : vector<32x64xf32>
    %59 = vector.broadcast %56 : vector<1x64xf32> to vector<32x64xf32>
    %60 = arith.mulf %58, %59 : vector<32x64xf32>
    %61 = vector.broadcast %36 : vector<1x64xf32> to vector<32x64xf32>
    %62 = arith.mulf %60, %61 : vector<32x64xf32>
    %63 = vector.broadcast %38 : vector<1x64xf32> to vector<32x64xf32>
    %64 = arith.addf %62, %63 : vector<32x64xf32>
    %c0_29 = arith.constant 0 : index
    %c0_30 = arith.constant 0 : index
    %c0_31 = arith.constant 0 : index
    %65 = vector.load %arg6[%c0_29, %c0_30, %c0_31] : memref<3x192x64xbf16, #tpu.memory_space<vmem>>, vector<1x192x64xbf16>
    %66 = vector.shape_cast %65 : vector<1x192x64xbf16> to vector<192x64xbf16>
    %c0_32 = arith.constant 0 : index
    %c0_33 = arith.constant 0 : index
    %c0_34 = arith.constant 0 : index
    %67 = vector.load %arg7[%c0_32, %c0_33, %c0_34] : memref<3x1x64xf32, #tpu.memory_space<vmem>>, vector<1x1x64xf32>
    %68 = vector.shape_cast %67 : vector<1x1x64xf32> to vector<1x64xf32>
    %69 = arith.truncf %64 : vector<32x64xf32> to vector<32x64xbf16>
    %c1_i32_35 = arith.constant 1 : i32
    %70 = tpu.dynamic_rotate %64 by %c1_i32_35 dim 0 : vector<32x64xf32>, i32 -> vector<32x64xf32>
    %cst_36 = arith.constant 0.000000e+00 : f32
    %71 = vector.broadcast %cst_36 : f32 to vector<32x64xf32>
    %72 = arith.select %3, %70, %71 : vector<32x64xi1>, vector<32x64xf32>
    %73 = arith.truncf %72 : vector<32x64xf32> to vector<32x64xbf16>
    %c31_i32_37 = arith.constant 31 : i32
    %74 = tpu.dynamic_rotate %64 by %c31_i32_37 dim 0 : vector<32x64xf32>, i32 -> vector<32x64xf32>
    %cst_38 = arith.constant 0.000000e+00 : f32
    %75 = vector.broadcast %cst_38 : f32 to vector<32x64xf32>
    %76 = arith.select %5, %74, %75 : vector<32x64xi1>, vector<32x64xf32>
    %77 = arith.truncf %76 : vector<32x64xf32> to vector<32x64xbf16>
    %78 = tpu.concatenate %73, %69, %77 in 1 : vector<32x64xbf16>, vector<32x64xbf16>, vector<32x64xbf16> -> vector<32x192xbf16>
    %cst_39 = arith.constant dense<0.000000e+00> : vector<32x64xf32>
    %79 = tpu.matmul %78, %66, %cst_39 {dimension_numbers = #tpu.dot_dimension_numbers<[1], [0], [0], [1], [0, 0, 1, 1], [], []>} : vector<32x192xbf16>, vector<192x64xbf16>, vector<32x64xf32> -> vector<32x64xf32>
    %80 = vector.broadcast %68 : vector<1x64xf32> to vector<32x64xf32>
    %81 = arith.addf %79, %80 : vector<32x64xf32>
    %cst_40 = arith.constant 0.000000e+00 : f32
    %82 = vector.broadcast %cst_40 : f32 to vector<32x64xf32>
    %83 = arith.maximumf %81, %82 : vector<32x64xf32>
    %84 = arith.addf %83, %15 : vector<32x64xf32>
    %c1 = arith.constant 1 : index
    %c0_41 = arith.constant 0 : index
    %c0_42 = arith.constant 0 : index
    %85 = vector.load %arg2[%c1, %c0_41, %c0_42] : memref<3x192x64xbf16, #tpu.memory_space<vmem>>, vector<1x192x64xbf16>
    %86 = vector.shape_cast %85 : vector<1x192x64xbf16> to vector<192x64xbf16>
    %c1_43 = arith.constant 1 : index
    %c0_44 = arith.constant 0 : index
    %c0_45 = arith.constant 0 : index
    %87 = vector.load %arg3[%c1_43, %c0_44, %c0_45] : memref<3x1x64xf32, #tpu.memory_space<vmem>>, vector<1x1x64xf32>
    %88 = vector.shape_cast %87 : vector<1x1x64xf32> to vector<1x64xf32>
    %89 = arith.truncf %84 : vector<32x64xf32> to vector<32x64xbf16>
    %c3_i32_46 = arith.constant 3 : i32
    %90 = tpu.dynamic_rotate %84 by %c3_i32_46 dim 0 : vector<32x64xf32>, i32 -> vector<32x64xf32>
    %cst_47 = arith.constant 0.000000e+00 : f32
    %91 = vector.broadcast %cst_47 : f32 to vector<32x64xf32>
    %92 = arith.select %7, %90, %91 : vector<32x64xi1>, vector<32x64xf32>
    %93 = arith.truncf %92 : vector<32x64xf32> to vector<32x64xbf16>
    %c29_i32_48 = arith.constant 29 : i32
    %94 = tpu.dynamic_rotate %84 by %c29_i32_48 dim 0 : vector<32x64xf32>, i32 -> vector<32x64xf32>
    %cst_49 = arith.constant 0.000000e+00 : f32
    %95 = vector.broadcast %cst_49 : f32 to vector<32x64xf32>
    %96 = arith.select %9, %94, %95 : vector<32x64xi1>, vector<32x64xf32>
    %97 = arith.truncf %96 : vector<32x64xf32> to vector<32x64xbf16>
    %98 = tpu.concatenate %93, %89, %97 in 1 : vector<32x64xbf16>, vector<32x64xbf16>, vector<32x64xbf16> -> vector<32x192xbf16>
    %cst_50 = arith.constant dense<0.000000e+00> : vector<32x64xf32>
    %99 = tpu.matmul %98, %86, %cst_50 {dimension_numbers = #tpu.dot_dimension_numbers<[1], [0], [0], [1], [0, 0, 1, 1], [], []>} : vector<32x192xbf16>, vector<192x64xbf16>, vector<32x64xf32> -> vector<32x64xf32>
    %100 = vector.broadcast %88 : vector<1x64xf32> to vector<32x64xf32>
    %101 = arith.addf %99, %100 : vector<32x64xf32>
    %cst_51 = arith.constant 0.000000e+00 : f32
    %102 = vector.broadcast %cst_51 : f32 to vector<32x64xf32>
    %103 = arith.maximumf %101, %102 : vector<32x64xf32>
    %c1_52 = arith.constant 1 : index
    %c0_53 = arith.constant 0 : index
    %c0_54 = arith.constant 0 : index
    %104 = vector.load %arg4[%c1_52, %c0_53, %c0_54] : memref<3x1x64xf32, #tpu.memory_space<vmem>>, vector<1x1x64xf32>
    %105 = vector.shape_cast %104 : vector<1x1x64xf32> to vector<1x64xf32>
    %c1_55 = arith.constant 1 : index
    %c0_56 = arith.constant 0 : index
    %c0_57 = arith.constant 0 : index
    %106 = vector.load %arg5[%c1_55, %c0_56, %c0_57] : memref<3x1x64xf32, #tpu.memory_space<vmem>>, vector<1x1x64xf32>
    %107 = vector.shape_cast %106 : vector<1x1x64xf32> to vector<1x64xf32>
    %cst_58 = arith.constant dense<0.000000e+00> : vector<64xf32>
    %108 = vector.multi_reduction <add>, %103, %cst_58 [0] : vector<32x64xf32> to vector<64xf32>
    %109 = vector.shape_cast %108 : vector<64xf32> to vector<1x64xf32>
    %110 = arith.mulf %103, %103 : vector<32x64xf32>
    %cst_59 = arith.constant dense<0.000000e+00> : vector<64xf32>
    %111 = vector.multi_reduction <add>, %110, %cst_59 [0] : vector<32x64xf32> to vector<64xf32>
    %112 = vector.shape_cast %111 : vector<64xf32> to vector<1x64xf32>
    %cst_60 = arith.constant dense<0.000000e+00> : vector<1x64xf32>
    %113 = tpu.matmul %109, %0, %cst_60 {dimension_numbers = #tpu.dot_dimension_numbers<[1], [0], [0], [1], [0, 0, 1, 1], [], []>} : vector<1x64xf32>, vector<64x64xf32>, vector<1x64xf32> -> vector<1x64xf32>
    %cst_61 = arith.constant 3.906250e-03 : f32
    %114 = vector.broadcast %cst_61 : f32 to vector<1x64xf32>
    %115 = arith.mulf %113, %114 : vector<1x64xf32>
    %cst_62 = arith.constant dense<0.000000e+00> : vector<1x64xf32>
    %116 = tpu.matmul %112, %0, %cst_62 {dimension_numbers = #tpu.dot_dimension_numbers<[1], [0], [0], [1], [0, 0, 1, 1], [], []>} : vector<1x64xf32>, vector<64x64xf32>, vector<1x64xf32> -> vector<1x64xf32>
    %cst_63 = arith.constant 3.906250e-03 : f32
    %117 = vector.broadcast %cst_63 : f32 to vector<1x64xf32>
    %118 = arith.mulf %116, %117 : vector<1x64xf32>
    %119 = arith.mulf %115, %115 : vector<1x64xf32>
    %120 = arith.subf %118, %119 : vector<1x64xf32>
    %cst_64 = arith.constant 0.000000e+00 : f32
    %121 = vector.broadcast %cst_64 : f32 to vector<1x64xf32>
    %122 = arith.maximumf %120, %121 : vector<1x64xf32>
    %cst_65 = arith.constant 9.99999974E-6 : f32
    %123 = vector.broadcast %cst_65 : f32 to vector<1x64xf32>
    %124 = arith.addf %122, %123 : vector<1x64xf32>
    %125 = math.rsqrt %124 : vector<1x64xf32>
    %126 = vector.broadcast %115 : vector<1x64xf32> to vector<32x64xf32>
    %127 = arith.subf %103, %126 : vector<32x64xf32>
    %128 = vector.broadcast %125 : vector<1x64xf32> to vector<32x64xf32>
    %129 = arith.mulf %127, %128 : vector<32x64xf32>
    %130 = vector.broadcast %105 : vector<1x64xf32> to vector<32x64xf32>
    %131 = arith.mulf %129, %130 : vector<32x64xf32>
    %132 = vector.broadcast %107 : vector<1x64xf32> to vector<32x64xf32>
    %133 = arith.addf %131, %132 : vector<32x64xf32>
    %c1_66 = arith.constant 1 : index
    %c0_67 = arith.constant 0 : index
    %c0_68 = arith.constant 0 : index
    %134 = vector.load %arg6[%c1_66, %c0_67, %c0_68] : memref<3x192x64xbf16, #tpu.memory_space<vmem>>, vector<1x192x64xbf16>
    %135 = vector.shape_cast %134 : vector<1x192x64xbf16> to vector<192x64xbf16>
    %c1_69 = arith.constant 1 : index
    %c0_70 = arith.constant 0 : index
    %c0_71 = arith.constant 0 : index
    %136 = vector.load %arg7[%c1_69, %c0_70, %c0_71] : memref<3x1x64xf32, #tpu.memory_space<vmem>>, vector<1x1x64xf32>
    %137 = vector.shape_cast %136 : vector<1x1x64xf32> to vector<1x64xf32>
    %138 = arith.truncf %133 : vector<32x64xf32> to vector<32x64xbf16>
    %c1_i32_72 = arith.constant 1 : i32
    %139 = tpu.dynamic_rotate %133 by %c1_i32_72 dim 0 : vector<32x64xf32>, i32 -> vector<32x64xf32>
    %cst_73 = arith.constant 0.000000e+00 : f32
    %140 = vector.broadcast %cst_73 : f32 to vector<32x64xf32>
    %141 = arith.select %3, %139, %140 : vector<32x64xi1>, vector<32x64xf32>
    %142 = arith.truncf %141 : vector<32x64xf32> to vector<32x64xbf16>
    %c31_i32_74 = arith.constant 31 : i32
    %143 = tpu.dynamic_rotate %133 by %c31_i32_74 dim 0 : vector<32x64xf32>, i32 -> vector<32x64xf32>
    %cst_75 = arith.constant 0.000000e+00 : f32
    %144 = vector.broadcast %cst_75 : f32 to vector<32x64xf32>
    %145 = arith.select %5, %143, %144 : vector<32x64xi1>, vector<32x64xf32>
    %146 = arith.truncf %145 : vector<32x64xf32> to vector<32x64xbf16>
    %147 = tpu.concatenate %142, %138, %146 in 1 : vector<32x64xbf16>, vector<32x64xbf16>, vector<32x64xbf16> -> vector<32x192xbf16>
    %cst_76 = arith.constant dense<0.000000e+00> : vector<32x64xf32>
    %148 = tpu.matmul %147, %135, %cst_76 {dimension_numbers = #tpu.dot_dimension_numbers<[1], [0], [0], [1], [0, 0, 1, 1], [], []>} : vector<32x192xbf16>, vector<192x64xbf16>, vector<32x64xf32> -> vector<32x64xf32>
    %149 = vector.broadcast %137 : vector<1x64xf32> to vector<32x64xf32>
    %150 = arith.addf %148, %149 : vector<32x64xf32>
    %cst_77 = arith.constant 0.000000e+00 : f32
    %151 = vector.broadcast %cst_77 : f32 to vector<32x64xf32>
    %152 = arith.maximumf %150, %151 : vector<32x64xf32>
    %153 = arith.addf %152, %84 : vector<32x64xf32>
    %c2 = arith.constant 2 : index
    %c0_78 = arith.constant 0 : index
    %c0_79 = arith.constant 0 : index
    %154 = vector.load %arg2[%c2, %c0_78, %c0_79] : memref<3x192x64xbf16, #tpu.memory_space<vmem>>, vector<1x192x64xbf16>
    %155 = vector.shape_cast %154 : vector<1x192x64xbf16> to vector<192x64xbf16>
    %c2_80 = arith.constant 2 : index
    %c0_81 = arith.constant 0 : index
    %c0_82 = arith.constant 0 : index
    %156 = vector.load %arg3[%c2_80, %c0_81, %c0_82] : memref<3x1x64xf32, #tpu.memory_space<vmem>>, vector<1x1x64xf32>
    %157 = vector.shape_cast %156 : vector<1x1x64xf32> to vector<1x64xf32>
    %158 = arith.truncf %153 : vector<32x64xf32> to vector<32x64xbf16>
    %c9_i32_83 = arith.constant 9 : i32
    %159 = tpu.dynamic_rotate %153 by %c9_i32_83 dim 0 : vector<32x64xf32>, i32 -> vector<32x64xf32>
    %cst_84 = arith.constant 0.000000e+00 : f32
    %160 = vector.broadcast %cst_84 : f32 to vector<32x64xf32>
    %161 = arith.select %11, %159, %160 : vector<32x64xi1>, vector<32x64xf32>
    %162 = arith.truncf %161 : vector<32x64xf32> to vector<32x64xbf16>
    %c23_i32_85 = arith.constant 23 : i32
    %163 = tpu.dynamic_rotate %153 by %c23_i32_85 dim 0 : vector<32x64xf32>, i32 -> vector<32x64xf32>
    %cst_86 = arith.constant 0.000000e+00 : f32
    %164 = vector.broadcast %cst_86 : f32 to vector<32x64xf32>
    %165 = arith.select %13, %163, %164 : vector<32x64xi1>, vector<32x64xf32>
    %166 = arith.truncf %165 : vector<32x64xf32> to vector<32x64xbf16>
    %167 = tpu.concatenate %162, %158, %166 in 1 : vector<32x64xbf16>, vector<32x64xbf16>, vector<32x64xbf16> -> vector<32x192xbf16>
    %cst_87 = arith.constant dense<0.000000e+00> : vector<32x64xf32>
    %168 = tpu.matmul %167, %155, %cst_87 {dimension_numbers = #tpu.dot_dimension_numbers<[1], [0], [0], [1], [0, 0, 1, 1], [], []>} : vector<32x192xbf16>, vector<192x64xbf16>, vector<32x64xf32> -> vector<32x64xf32>
    %169 = vector.broadcast %157 : vector<1x64xf32> to vector<32x64xf32>
    %170 = arith.addf %168, %169 : vector<32x64xf32>
    %cst_88 = arith.constant 0.000000e+00 : f32
    %171 = vector.broadcast %cst_88 : f32 to vector<32x64xf32>
    %172 = arith.maximumf %170, %171 : vector<32x64xf32>
    %c2_89 = arith.constant 2 : index
    %c0_90 = arith.constant 0 : index
    %c0_91 = arith.constant 0 : index
    %173 = vector.load %arg4[%c2_89, %c0_90, %c0_91] : memref<3x1x64xf32, #tpu.memory_space<vmem>>, vector<1x1x64xf32>
    %174 = vector.shape_cast %173 : vector<1x1x64xf32> to vector<1x64xf32>
    %c2_92 = arith.constant 2 : index
    %c0_93 = arith.constant 0 : index
    %c0_94 = arith.constant 0 : index
    %175 = vector.load %arg5[%c2_92, %c0_93, %c0_94] : memref<3x1x64xf32, #tpu.memory_space<vmem>>, vector<1x1x64xf32>
    %176 = vector.shape_cast %175 : vector<1x1x64xf32> to vector<1x64xf32>
    %cst_95 = arith.constant dense<0.000000e+00> : vector<64xf32>
    %177 = vector.multi_reduction <add>, %172, %cst_95 [0] : vector<32x64xf32> to vector<64xf32>
    %178 = vector.shape_cast %177 : vector<64xf32> to vector<1x64xf32>
    %179 = arith.mulf %172, %172 : vector<32x64xf32>
    %cst_96 = arith.constant dense<0.000000e+00> : vector<64xf32>
    %180 = vector.multi_reduction <add>, %179, %cst_96 [0] : vector<32x64xf32> to vector<64xf32>
    %181 = vector.shape_cast %180 : vector<64xf32> to vector<1x64xf32>
    %cst_97 = arith.constant dense<0.000000e+00> : vector<1x64xf32>
    %182 = tpu.matmul %178, %0, %cst_97 {dimension_numbers = #tpu.dot_dimension_numbers<[1], [0], [0], [1], [0, 0, 1, 1], [], []>} : vector<1x64xf32>, vector<64x64xf32>, vector<1x64xf32> -> vector<1x64xf32>
    %cst_98 = arith.constant 3.906250e-03 : f32
    %183 = vector.broadcast %cst_98 : f32 to vector<1x64xf32>
    %184 = arith.mulf %182, %183 : vector<1x64xf32>
    %cst_99 = arith.constant dense<0.000000e+00> : vector<1x64xf32>
    %185 = tpu.matmul %181, %0, %cst_99 {dimension_numbers = #tpu.dot_dimension_numbers<[1], [0], [0], [1], [0, 0, 1, 1], [], []>} : vector<1x64xf32>, vector<64x64xf32>, vector<1x64xf32> -> vector<1x64xf32>
    %cst_100 = arith.constant 3.906250e-03 : f32
    %186 = vector.broadcast %cst_100 : f32 to vector<1x64xf32>
    %187 = arith.mulf %185, %186 : vector<1x64xf32>
    %188 = arith.mulf %184, %184 : vector<1x64xf32>
    %189 = arith.subf %187, %188 : vector<1x64xf32>
    %cst_101 = arith.constant 0.000000e+00 : f32
    %190 = vector.broadcast %cst_101 : f32 to vector<1x64xf32>
    %191 = arith.maximumf %189, %190 : vector<1x64xf32>
    %cst_102 = arith.constant 9.99999974E-6 : f32
    %192 = vector.broadcast %cst_102 : f32 to vector<1x64xf32>
    %193 = arith.addf %191, %192 : vector<1x64xf32>
    %194 = math.rsqrt %193 : vector<1x64xf32>
    %195 = vector.broadcast %184 : vector<1x64xf32> to vector<32x64xf32>
    %196 = arith.subf %172, %195 : vector<32x64xf32>
    %197 = vector.broadcast %194 : vector<1x64xf32> to vector<32x64xf32>
    %198 = arith.mulf %196, %197 : vector<32x64xf32>
    %199 = vector.broadcast %174 : vector<1x64xf32> to vector<32x64xf32>
    %200 = arith.mulf %198, %199 : vector<32x64xf32>
    %201 = vector.broadcast %176 : vector<1x64xf32> to vector<32x64xf32>
    %202 = arith.addf %200, %201 : vector<32x64xf32>
    %c2_103 = arith.constant 2 : index
    %c0_104 = arith.constant 0 : index
    %c0_105 = arith.constant 0 : index
    %203 = vector.load %arg6[%c2_103, %c0_104, %c0_105] : memref<3x192x64xbf16, #tpu.memory_space<vmem>>, vector<1x192x64xbf16>
    %204 = vector.shape_cast %203 : vector<1x192x64xbf16> to vector<192x64xbf16>
    %c2_106 = arith.constant 2 : index
    %c0_107 = arith.constant 0 : index
    %c0_108 = arith.constant 0 : index
    %205 = vector.load %arg7[%c2_106, %c0_107, %c0_108] : memref<3x1x64xf32, #tpu.memory_space<vmem>>, vector<1x1x64xf32>
    %206 = vector.shape_cast %205 : vector<1x1x64xf32> to vector<1x64xf32>
    %207 = arith.truncf %202 : vector<32x64xf32> to vector<32x64xbf16>
    %c1_i32_109 = arith.constant 1 : i32
    %208 = tpu.dynamic_rotate %202 by %c1_i32_109 dim 0 : vector<32x64xf32>, i32 -> vector<32x64xf32>
    %cst_110 = arith.constant 0.000000e+00 : f32
    %209 = vector.broadcast %cst_110 : f32 to vector<32x64xf32>
    %210 = arith.select %3, %208, %209 : vector<32x64xi1>, vector<32x64xf32>
    %211 = arith.truncf %210 : vector<32x64xf32> to vector<32x64xbf16>
    %c31_i32_111 = arith.constant 31 : i32
    %212 = tpu.dynamic_rotate %202 by %c31_i32_111 dim 0 : vector<32x64xf32>, i32 -> vector<32x64xf32>
    %cst_112 = arith.constant 0.000000e+00 : f32
    %213 = vector.broadcast %cst_112 : f32 to vector<32x64xf32>
    %214 = arith.select %5, %212, %213 : vector<32x64xi1>, vector<32x64xf32>
    %215 = arith.truncf %214 : vector<32x64xf32> to vector<32x64xbf16>
    %216 = tpu.concatenate %211, %207, %215 in 1 : vector<32x64xbf16>, vector<32x64xbf16>, vector<32x64xbf16> -> vector<32x192xbf16>
    %cst_113 = arith.constant dense<0.000000e+00> : vector<32x64xf32>
    %217 = tpu.matmul %216, %204, %cst_113 {dimension_numbers = #tpu.dot_dimension_numbers<[1], [0], [0], [1], [0, 0, 1, 1], [], []>} : vector<32x192xbf16>, vector<192x64xbf16>, vector<32x64xf32> -> vector<32x64xf32>
    %218 = vector.broadcast %206 : vector<1x64xf32> to vector<32x64xf32>
    %219 = arith.addf %217, %218 : vector<32x64xf32>
    %cst_114 = arith.constant 0.000000e+00 : f32
    %220 = vector.broadcast %cst_114 : f32 to vector<32x64xf32>
    %221 = arith.maximumf %219, %220 : vector<32x64xf32>
    %222 = arith.addf %221, %153 : vector<32x64xf32>
    %c0_115 = arith.constant 0 : index
    %c0_116 = arith.constant 0 : index
    %c0_117 = arith.constant 0 : index
    %223 = vector.load %arg9[%c0_115, %c0_116, %c0_117] : memref<1x32x64xf32, #tpu.memory_space<vmem>>, vector<1x32x64xf32>
    %224 = vector.shape_cast %223 : vector<1x32x64xf32> to vector<32x64xf32>
    %225 = vector.shape_cast %222 : vector<32x64xf32> to vector<1x32x64xf32>
    tpu.vector_store %arg9[%c0_115, %c0_116, %c0_117], %225 {strides = array<i32>} : memref<1x32x64xf32, #tpu.memory_space<vmem>>, vector<1x32x64xf32>,
    return
  }
  func.func @transform_0(%arg0: i32) -> (i32, i32, i32) {
    %c0_i32 = arith.constant 0 : i32
    %c0_i32_0 = arith.constant 0 : i32
    %c0_i32_1 = arith.constant 0 : i32
    return %arg0, %c0_i32, %c0_i32_0 : i32, i32, i32
  }
  func.func @transform_1(%arg0: i32) -> (i32, i32, i32) {
    %c0_i32 = arith.constant 0 : i32
    %c0_i32_0 = arith.constant 0 : i32
    %c0_i32_1 = arith.constant 0 : i32
    %c0_i32_2 = arith.constant 0 : i32
    return %c0_i32, %c0_i32_0, %c0_i32_1 : i32, i32, i32
  }
  func.func @transform_2(%arg0: i32) -> (i32, i32, i32) {
    %c0_i32 = arith.constant 0 : i32
    %c0_i32_0 = arith.constant 0 : i32
    %c0_i32_1 = arith.constant 0 : i32
    %c0_i32_2 = arith.constant 0 : i32
    return %c0_i32, %c0_i32_0, %c0_i32_1 : i32, i32, i32
  }
  func.func @transform_3(%arg0: i32) -> (i32, i32, i32) {
    %c0_i32 = arith.constant 0 : i32
    %c0_i32_0 = arith.constant 0 : i32
    %c0_i32_1 = arith.constant 0 : i32
    %c0_i32_2 = arith.constant 0 : i32
    return %c0_i32, %c0_i32_0, %c0_i32_1 : i32, i32, i32
  }
  func.func @transform_4(%arg0: i32) -> (i32, i32, i32) {
    %c0_i32 = arith.constant 0 : i32
    %c0_i32_0 = arith.constant 0 : i32
    %c0_i32_1 = arith.constant 0 : i32
    %c0_i32_2 = arith.constant 0 : i32
    return %c0_i32, %c0_i32_0, %c0_i32_1 : i32, i32, i32
  }
  func.func @transform_5(%arg0: i32) -> (i32, i32, i32) {
    %c0_i32 = arith.constant 0 : i32
    %c0_i32_0 = arith.constant 0 : i32
    %c0_i32_1 = arith.constant 0 : i32
    %c0_i32_2 = arith.constant 0 : i32
    return %c0_i32, %c0_i32_0, %c0_i32_1 : i32, i32, i32
  }
  func.func @transform_6(%arg0: i32) -> (i32, i32, i32) {
    %c0_i32 = arith.constant 0 : i32
    %c0_i32_0 = arith.constant 0 : i32
    %c0_i32_1 = arith.constant 0 : i32
    %c0_i32_2 = arith.constant 0 : i32
    return %c0_i32, %c0_i32_0, %c0_i32_1 : i32, i32, i32
  }
  func.func @transform_7(%arg0: i32) -> (i32, i32) {
    %c0_i32 = arith.constant 0 : i32
    %c0_i32_0 = arith.constant 0 : i32
    %c0_i32_1 = arith.constant 0 : i32
    return %c0_i32, %c0_i32_0 : i32, i32
  }
  func.func @transform_8(%arg0: i32) -> (i32, i32, i32) {
    %c0_i32 = arith.constant 0 : i32
    %c0_i32_0 = arith.constant 0 : i32
    %c0_i32_1 = arith.constant 0 : i32
    return %arg0, %c0_i32, %c0_i32_0 : i32, i32, i32
  }
}

</mosaic_0001>

<llo_original>
// kernel: tpu_custom_call.1
$region0: #{tpu_custom_call.1}
  #allocation0 [shape = 'u32[]', space=smem, size = 0x4, offset = 0x4, fixed_abs, tag = 'smem constant byte address 0x4 - core index']
  #allocation1 [shape = 'u32[72,128]{1,0:T(1,128)}', space=vmem, size = 0x9000, scoped, tag = 'internal scratch']
  %s0 = inlined_call_operand.vmem [shape: f32[2,32,64], index: 0, kind: input, shape index: {}]
  %s1 = inlined_call_operand.vmem [shape: bf16[3,192,64], index: 1, kind: input, shape index: {}]
  %s2 = inlined_call_operand.vmem [shape: f32[3,1,64], index: 2, kind: input, shape index: {}]
  %s3 = inlined_call_operand.vmem [shape: f32[3,1,64], index: 3, kind: input, shape index: {}]
  %s4 = inlined_call_operand.vmem [shape: f32[3,1,64], index: 4, kind: input, shape index: {}]
  %s5 = inlined_call_operand.vmem [shape: bf16[3,192,64], index: 5, kind: input, shape index: {}]
  %s6 = inlined_call_operand.vmem [shape: f32[3,1,64], index: 6, kind: input, shape index: {}]
  %s7 = inlined_call_operand.vmem [shape: f32[64,64], index: 7, kind: input, shape index: {}]
  %s8 = inlined_call_operand.hbm [shape: f32[2,32,64], index: 8, kind: output, shape index: {}]
  %s9 = sld [smem:[#allocation0]]
  $region65: #{tpu_custom_call.1} parent=0
    _
  %s11 = ssub.s32 1, %s9
  %s12 = scalar_select 0, %s11, %s9
  $region1: #{tpu_custom_call.1} parent=0
    #allocation2 [shape = 'u8[32768]{0}', space=vmem, size = 0x8000, scoped, tag = 'output window, operand 0']
    #allocation3 [shape = 's32[2]{0}', space=sflag, size = 0x8, scoped, tag = 'scoped memory for tpu_custom_call.1']
    %13 = vsyncpa [#allocation3], 0
    %s14 = scalar_lea.sflag [#allocation3], 1
    %15 = vsyncpa %s14, 0
    loop: start=0, step=1, limit=4
    $region2: #{tpu_custom_call.1} parent=1 // loop_pre_header
      _
    $region3: #{tpu_custom_call.1} parent=1 // loop_header
      %s17 = sphi 0, %s21
      %p18 = scmp.ge.s32.totalorder %s17, 4
      %s27 = sphi 0, %s29
      %s30 = sphi 0, %s27
      %s31 = sphi 0, %s30
      %s47 = sphi 0, %s31
      %s51 = sphi 0, %s51
      %s53 = sphi 0, %s51
      %s54 = sphi 0, %s53
      %s68 = sphi 0, %s54
      %s72 = sphi 0, %s72
      %s74 = sphi 0, %s72
      %s75 = sphi 0, %s74
      %s89 = sphi 0, %s75
      %s93 = sphi 0, %s93
      %s95 = sphi 0, %s93
      %s96 = sphi 0, %s95
      %s110 = sphi 0, %s96
      %s114 = sphi 0, %s114
      %s116 = sphi 0, %s114
      %s117 = sphi 0, %s116
      %s131 = sphi 0, %s117
      %s135 = sphi 0, %s135
      %s137 = sphi 0, %s135
      %s138 = sphi 0, %s137
      %s152 = sphi 0, %s138
      %s156 = sphi 0, %s156
      %s158 = sphi 0, %s156
      %s159 = sphi 0, %s158
      %s173 = sphi 0, %s159
      %s177 = sphi 0, %s177
      %s179 = sphi 0, %s177
      %s180 = sphi 0, %s179
      %s194 = sphi 0, %s180
      %s200 = sphi 0, %s202
      %s203 = sphi 0, %s200
      %s204 = sphi 0, %s203
      %s220 = sphi 0, %s204
    $region4: #{tpu_custom_call.1} parent=1 // loop_header_branch
      %20 = sbr.rel (%p18) target = $region8
    $region5: #{tpu_custom_call.1} parent=1 // loop_body
      %s22 = ssub.s32 %s17, 1
      %s23 = ssub.s32 %s17, 2
      %s24 = sadd.s32 %s17, 1
      %s25 = ssub.s32 %s17, %s24
      %p26 = scmp.eq.s32.totalorder %s25, 0
      %s28 = sadd.s32 %s27, 1
      %s29 = scalar_select %p26, %s27, %s28
      %p32 = pneg %p26
      %p33 = scmp.eq.s32.totalorder %s17, 1
      %p34 = por %p32, %p33
      %p35 = scmp.ne.s32.totalorder %s27, %s30
      %p36 = scmp.eq.s32.totalorder %s17, 0
      %p37 = por %p35, %p36
      %p38 = scmp.ne.s32.totalorder %s27, %s30
      %p39 = scmp.eq.s32.totalorder %s22, 1
      %p40 = por %p38, %p39
      %p41 = scmp.ne.s32.totalorder %s30, %s31
      %p42 = scmp.eq.s32.totalorder %s22, 0
      %p43 = por %p41, %p42
      %p44 = scmp.ne.s32.totalorder %s30, %s31
      %p45 = scmp.eq.s32.totalorder %s23, 1
      %p46 = por %p44, %p45
      %p48 = scmp.ne.s32.totalorder %s31, %s47
      %p49 = scmp.eq.s32.totalorder %s23, 0
      %p50 = por %p48, %p49
      %s52 = sadd.s32 %s51, 1
      %p55 = scmp.eq.s32.totalorder %s17, 1
      %p56 = scmp.ne.s32.totalorder %s51, %s53
      %p57 = scmp.eq.s32.totalorder %s17, 0
      %p58 = por %p56, %p57
      %p59 = scmp.ne.s32.totalorder %s51, %s53
      %p60 = scmp.eq.s32.totalorder %s22, 1
      %p61 = por %p59, %p60
      %p62 = scmp.ne.s32.totalorder %s53, %s54
      %p63 = scmp.eq.s32.totalorder %s22, 0
      %p64 = por %p62, %p63
      %p65 = scmp.ne.s32.totalorder %s53, %s54
      %p66 = scmp.eq.s32.totalorder %s23, 1
      %p67 = por %p65, %p66
      %p69 = scmp.ne.s32.totalorder %s54, %s68
      %p70 = scmp.eq.s32.totalorder %s23, 0
      %p71 = por %p69, %p70
      %s73 = sadd.s32 %s72, 1
      %p76 = scmp.eq.s32.totalorder %s17, 1
      %p77 = scmp.ne.s32.totalorder %s72, %s74
      %p78 = scmp.eq.s32.totalorder %s17, 0
      %p79 = por %p77, %p78
      %p80 = scmp.ne.s32.totalorder %s72, %s74
      %p81 = scmp.eq.s32.totalorder %s22, 1
      %p82 = por %p80, %p81
      %p83 = scmp.ne.s32.totalorder %s74, %s75
      %p84 = scmp.eq.s32.totalorder %s22, 0
      %p85 = por %p83, %p84
      %p86 = scmp.ne.s32.totalorder %s74, %s75
      %p87 = scmp.eq.s32.totalorder %s23, 1
      %p88 = por %p86, %p87
      %p90 = scmp.ne.s32.totalorder %s75, %s89
      %p91 = scmp.eq.s32.totalorder %s23, 0
      %p92 = por %p90, %p91
      %s94 = sadd.s32 %s93, 1
      %p97 = scmp.eq.s32.totalorder %s17, 1
      %p98 = scmp.ne.s32.totalorder %s93, %s95
      %p99 = scmp.eq.s32.totalorder %s17, 0
      %p100 = por %p98, %p99
      %p101 = scmp.ne.s32.totalorder %s93, %s95
      %p102 = scmp.eq.s32.totalorder %s22, 1
      %p103 = por %p101, %p102
      %p104 = scmp.ne.s32.totalorder %s95, %s96
      %p105 = scmp.eq.s32.totalorder %s22, 0
      %p106 = por %p104, %p105
      %p107 = scmp.ne.s32.totalorder %s95, %s96
      %p108 = scmp.eq.s32.totalorder %s23, 1
      %p109 = por %p107, %p108
      %p111 = scmp.ne.s32.totalorder %s96, %s110
      %p112 = scmp.eq.s32.totalorder %s23, 0
      %p113 = por %p111, %p112
      %s115 = sadd.s32 %s114, 1
      %p118 = scmp.eq.s32.totalorder %s17, 1
      %p119 = scmp.ne.s32.totalorder %s114, %s116
      %p120 = scmp.eq.s32.totalorder %s17, 0
      %p121 = por %p119, %p120
      %p122 = scmp.ne.s32.totalorder %s114, %s116
      %p123 = scmp.eq.s32.totalorder %s22, 1
      %p124 = por %p122, %p123
      %p125 = scmp.ne.s32.totalorder %s116, %s117
      %p126 = scmp.eq.s32.totalorder %s22, 0
      %p127 = por %p125, %p126
      %p128 = scmp.ne.s32.totalorder %s116, %s117
      %p129 = scmp.eq.s32.totalorder %s23, 1
      %p130 = por %p128, %p129
      %p132 = scmp.ne.s32.totalorder %s117, %s131
      %p133 = scmp.eq.s32.totalorder %s23, 0
      %p134 = por %p132, %p133
      %s136 = sadd.s32 %s135, 1
      %p139 = scmp.eq.s32.totalorder %s17, 1
      %p140 = scmp.ne.s32.totalorder %s135, %s137
      %p141 = scmp.eq.s32.totalorder %s17, 0
      %p142 = por %p140, %p141
      %p143 = scmp.ne.s32.totalorder %s135, %s137
      %p144 = scmp.eq.s32.totalorder %s22, 1
      %p145 = por %p143, %p144
      %p146 = scmp.ne.s32.totalorder %s137, %s138
      %p147 = scmp.eq.s32.totalorder %s22, 0
      %p148 = por %p146, %p147
      %p149 = scmp.ne.s32.totalorder %s137, %s138
      %p150 = scmp.eq.s32.totalorder %s23, 1
      %p151 = por %p149, %p150
      %p153 = scmp.ne.s32.totalorder %s138, %s152
      %p154 = scmp.eq.s32.totalorder %s23, 0
      %p155 = por %p153, %p154
      %s157 = sadd.s32 %s156, 1
      %p160 = scmp.eq.s32.totalorder %s17, 1
      %p161 = scmp.ne.s32.totalorder %s156, %s158
      %p162 = scmp.eq.s32.totalorder %s17, 0
      %p163 = por %p161, %p162
      %p164 = scmp.ne.s32.totalorder %s156, %s158
      %p165 = scmp.eq.s32.totalorder %s22, 1
      %p166 = por %p164, %p165
      %p167 = scmp.ne.s32.totalorder %s158, %s159
      %p168 = scmp.eq.s32.totalorder %s22, 0
      %p169 = por %p167, %p168
      %p170 = scmp.ne.s32.totalorder %s158, %s159
      %p171 = scmp.eq.s32.totalorder %s23, 1
      %p172 = por %p170, %p171
      %p174 = scmp.ne.s32.totalorder %s159, %s173
      %p175 = scmp.eq.s32.totalorder %s23, 0
      %p176 = por %p174, %p175
      %s178 = sadd.s32 %s177, 1
      %p181 = scmp.eq.s32.totalorder %s17, 1
      %p182 = scmp.ne.s32.totalorder %s177, %s179
      %p183 = scmp.eq.s32.totalorder %s17, 0
      %p184 = por %p182, %p183
      %p185 = scmp.ne.s32.totalorder %s177, %s179
      %p186 = scmp.eq.s32.totalorder %s22, 1
      %p187 = por %p185, %p186
      %p188 = scmp.ne.s32.totalorder %s179, %s180
      %p189 = scmp.eq.s32.totalorder %s22, 0
      %p190 = por %p188, %p189
      %p191 = scmp.ne.s32.totalorder %s179, %s180
      %p192 = scmp.eq.s32.totalorder %s23, 1
      %p193 = por %p191, %p192
      %p195 = scmp.ne.s32.totalorder %s180, %s194
      %p196 = scmp.eq.s32.totalorder %s23, 0
      %p197 = por %p195, %p196
      %s198 = ssub.s32 %s17, %s24
      %p199 = scmp.eq.s32.totalorder %s198, 0
      %s201 = sadd.s32 %s200, 1
      %s202 = scalar_select %p199, %s200, %s201
      %p205 = pneg %p199
      %p206 = scmp.eq.s32.totalorder %s17, 1
      %p207 = por %p205, %p206
      %p208 = scmp.ne.s32.totalorder %s200, %s203
      %p209 = scmp.eq.s32.totalorder %s17, 0
      %p210 = por %p208, %p209
      %p211 = scmp.ne.s32.totalorder %s200, %s203
      %p212 = scmp.eq.s32.totalorder %s22, 1
      %p213 = por %p211, %p212
      %p214 = scmp.ne.s32.totalorder %s203, %s204
      %p215 = scmp.eq.s32.totalorder %s22, 0
      %p216 = por %p214, %p215
      %p217 = scmp.ne.s32.totalorder %s203, %s204
      %p218 = scmp.eq.s32.totalorder %s23, 1
      %p219 = por %p217, %p218
      %p221 = scmp.ne.s32.totalorder %s204, %s220
      %p222 = scmp.eq.s32.totalorder %s23, 0
      %p223 = por %p221, %p222
      %p224 = scmp.le.s32.totalorder 1, %s17
      %p225 = scmp.lt.s32.totalorder %s17, 3
      %p226 = pnand %p224, %p225
      %p227 = pneg %p226
      // Predicated region
      $region9: #{tpu_custom_call.1} parent=5 // pred_check
        _
      $region10: #{tpu_custom_call.1} parent=5 // pred_check_branch
        %229 = sbr.rel (%p226) target = $region12
      $region11: #{tpu_custom_call.1} parent=5 // pred_region
        %s230 = ssub.s32 %s17, 1
        // Predicated region
        $region13: #{tpu_custom_call.1} parent=11 // pred_check
          %p231 = pneg %p64
        $region14: #{tpu_custom_call.1} parent=11 // pred_check_branch
          %233 = sbr.rel (%p231) target = $region16
        $region15: #{tpu_custom_call.1} parent=11 // pred_region
          _
        $region16: #{tpu_custom_call.1} parent=11 // pred_fallthru
          _
        // Predicated region
        $region17: #{tpu_custom_call.1} parent=11 // pred_check
          %p234 = pneg %p85
        $region18: #{tpu_custom_call.1} parent=11 // pred_check_branch
          %236 = sbr.rel (%p234) target = $region20
        $region19: #{tpu_custom_call.1} parent=11 // pred_region
          _
        $region20: #{tpu_custom_call.1} parent=11 // pred_fallthru
          _
        // Predicated region
        $region21: #{tpu_custom_call.1} parent=11 // pred_check
          %p237 = pneg %p106
        $region22: #{tpu_custom_call.1} parent=11 // pred_check_branch
          %239 = sbr.rel (%p237) target = $region24
        $region23: #{tpu_custom_call.1} parent=11 // pred_region
          _
        $region24: #{tpu_custom_call.1} parent=11 // pred_fallthru
          _
        // Predicated region
        $region25: #{tpu_custom_call.1} parent=11 // pred_check
          %p240 = pneg %p127
        $region26: #{tpu_custom_call.1} parent=11 // pred_check_branch
          %242 = sbr.rel (%p240) target = $region28
        $region27: #{tpu_custom_call.1} parent=11 // pred_region
          _
        $region28: #{tpu_custom_call.1} parent=11 // pred_fallthru
          _
        // Predicated region
        $region29: #{tpu_custom_call.1} parent=11 // pred_check
          %p243 = pneg %p148
        $region30: #{tpu_custom_call.1} parent=11 // pred_check_branch
          %245 = sbr.rel (%p243) target = $region32
        $region31: #{tpu_custom_call.1} parent=11 // pred_region
          _
        $region32: #{tpu_custom_call.1} parent=11 // pred_fallthru
          _
        // Predicated region
        $region33: #{tpu_custom_call.1} parent=11 // pred_check
          %p246 = pneg %p169
        $region34: #{tpu_custom_call.1} parent=11 // pred_check_branch
          %248 = sbr.rel (%p246) target = $region36
        $region35: #{tpu_custom_call.1} parent=11 // pred_region
          _
        $region36: #{tpu_custom_call.1} parent=11 // pred_fallthru
          _
        // Predicated region
        $region37: #{tpu_custom_call.1} parent=11 // pred_check
          %p249 = pneg %p190
        $region38: #{tpu_custom_call.1} parent=11 // pred_check_branch
          %251 = sbr.rel (%p249) target = $region40
        $region39: #{tpu_custom_call.1} parent=11 // pred_region
          _
        $region40: #{tpu_custom_call.1} parent=11 // pred_fallthru
          _
      $region12: #{tpu_custom_call.1} parent=5 // pred_fallthru
        _
      %p252 = scmp.lt.s32.totalorder %s17, 2
      // Predicated region
      $region41: #{tpu_custom_call.1} parent=5 // pred_check
        %p253 = pneg %p252
      $region42: #{tpu_custom_call.1} parent=5 // pred_check_branch
        %255 = sbr.rel (%p253) target = $region44
      $region43: #{tpu_custom_call.1} parent=5 // pred_region
        // Predicated region
        $region45: #{tpu_custom_call.1} parent=43 // pred_check
          %p256 = pneg %p37
        $region46: #{tpu_custom_call.1} parent=43 // pred_check_branch
          %258 = sbr.rel (%p256) target = $region48
        $region47: #{tpu_custom_call.1} parent=43 // pred_region
          %p259 = scmp.lt.s32.totalorder %s17, 1
          %s260 = scalar_select %p259, %s17, 1
          %s261 = smul.addr %s260, 4
          %s262 = smul.addr %s261, 8
          %s263 = scalar_lea.vmem %s0, %s262
        $region48: #{tpu_custom_call.1} parent=43 // pred_fallthru
          _
      $region44: #{tpu_custom_call.1} parent=5 // pred_fallthru
        _
      %p264 = scmp.le.s32.totalorder 1, %s17
      %p265 = scmp.lt.s32.totalorder %s17, 3
      %p266 = pnand %p264, %p265
      %p267 = pneg %p266
      // Predicated region
      $region49: #{tpu_custom_call.1} parent=5 // pred_check
        _
      $region50: #{tpu_custom_call.1} parent=5 // pred_check_branch
        %269 = sbr.rel (%p266) target = $region52
      $region51: #{tpu_custom_call.1} parent=5 // pred_region
        %s270 = ssub.s32 %s17, 1
        %p271 = scmp.lt.s32.totalorder %s22, 1
        %s272 = scalar_select %p271, %s22, 1
        %s273 = smul.addr %s272, 4
        %s274 = smul.addr %s273, 8
        %s275 = scalar_lea.vmem %s0, %s274
        %p276 = pneg %p43
        %p277 = pneg %p40
        %p278 = pneg %p64
        %p279 = pneg %p61
        %p280 = pneg %p85
        %p281 = pneg %p82
        %p282 = pneg %p106
        %p283 = pneg %p103
        %p284 = pneg %p127
        %p285 = pneg %p124
        %p286 = pneg %p148
        %p287 = pneg %p145
        %p288 = pneg %p169
        %p289 = pneg %p166
        %p290 = pneg %p190
        %p291 = pneg %p187
        %p292 = pneg %p216
        %p293 = pneg %p213
        %s294 = sand.u32 %s203, 1
        %s295 = scalar_lea.sflag [#allocation3], %s294
        %s296 = sand.u32 %s203, 1
        %s297 = smul.addr %s296, 32
        %s298 = scalar_lea.vmem [#allocation2], %s297
        %p299 = scmp.lt.s32.totalorder %s22, 1
        %s300 = scalar_select %p299, %s22, 1
        %s301 = smul.addr %s300, 4
        %s302 = smul.addr %s301, 8
        %s303 = scalar_lea.vmem %s0, %s302
        %v305 = vld [vmem:[%s7] sm:$0xff]
        %v306 = vld [vmem:[%s7 + $0x8] sm:$0xff]
        %v307 = vld [vmem:[%s7 + $0x10] sm:$0xff]
        %v308 = vld [vmem:[%s7 + $0x18] sm:$0xff]
        %v309 = vld [vmem:[%s7 + $0x20] sm:$0xff]
        %v310 = vld [vmem:[%s7 + $0x28] sm:$0xff]
        %v311 = vld [vmem:[%s7 + $0x30] sm:$0xff]
        %v312 = vld [vmem:[%s7 + $0x38] sm:$0xff]
        %v313 = vlaneseq
        %v314 = vshrl.u32 %v313, 7
        %v315 = vadd.s32 %v314, 8
        %v316 = vadd.s32 %v314, 16
        %v317 = vadd.s32 %v314, 24
        %vm318 = vcmp.ge.s32.totalorder %v314, 1
        %vm319 = vcmp.ge.s32.totalorder %v315, 1
        %vm320 = vcmp.ge.s32.totalorder %v316, 1
        %vm321 = vcmp.ge.s32.totalorder %v317, 1
        %vm322 = vcmp.lt.s32.totalorder %v314, 31
        %vm323 = vcmp.lt.s32.totalorder %v315, 31
        %vm324 = vcmp.lt.s32.totalorder %v316, 31
        %vm325 = vcmp.lt.s32.totalorder %v317, 31
        %vm326 = vcmp.ge.s32.totalorder %v314, 3
        %vm327 = vcmp.ge.s32.totalorder %v315, 3
        %vm328 = vcmp.ge.s32.totalorder %v316, 3
        %vm329 = vcmp.ge.s32.totalorder %v317, 3
        %vm330 = vcmp.lt.s32.totalorder %v314, 29
        %vm331 = vcmp.lt.s32.totalorder %v315, 29
        %vm332 = vcmp.lt.s32.totalorder %v316, 29
        %vm333 = vcmp.lt.s32.totalorder %v317, 29
        %vm334 = vcmp.ge.s32.totalorder %v314, 9
        %vm335 = vcmp.ge.s32.totalorder %v315, 9
        %vm336 = vcmp.ge.s32.totalorder %v316, 9
        %vm337 = vcmp.ge.s32.totalorder %v317, 9
        %vm338 = vcmp.lt.s32.totalorder %v314, 23
        %vm339 = vcmp.lt.s32.totalorder %v315, 23
        %vm340 = vcmp.lt.s32.totalorder %v316, 23
        %vm341 = vcmp.lt.s32.totalorder %v317, 23
        %v342 = vld [vmem:[%s303] sm:$0xff]
        %v343 = vld [vmem:[%s303 + $0x8] sm:$0xff]
        %v344 = vld [vmem:[%s303 + $0x10] sm:$0xff]
        %v345 = vld [vmem:[%s303 + $0x18] sm:$0xff]
        %v346 = vld [vmem:[%s1] sm:$0xf]
        %v347 = vld [vmem:[%s1 + $0x4] sm:$0xf]
        %v348 = vld [vmem:[%s1 + $0x8] sm:$0xf]
        %v349 = vld [vmem:[%s1 + $0xc] sm:$0xf]
        %v350 = vld [vmem:[%s1 + $0x10] sm:$0xf]
        %v351 = vld [vmem:[%s1 + $0x14] sm:$0xf]
        %v352 = vld [vmem:[%s1 + $0x18] sm:$0xf]
        %v353 = vld [vmem:[%s1 + $0x1c] sm:$0xf]
        %v354 = vld [vmem:[%s1 + $0x20] sm:$0xf]
        %v355 = vld [vmem:[%s1 + $0x24] sm:$0xf]
        %v356 = vld [vmem:[%s1 + $0x28] sm:$0xf]
        %v357 = vld [vmem:[%s1 + $0x2c] sm:$0xf]
        %v358 = vld [vmem:[%s1 + $0x30] sm:$0xf]
        %v359 = vld [vmem:[%s1 + $0x34] sm:$0xf]
        %v360 = vld [vmem:[%s1 + $0x38] sm:$0xf]
        %v361 = vld [vmem:[%s1 + $0x3c] sm:$0xf]
        %v362 = vld [vmem:[%s1 + $0x40] sm:$0xf]
        %v363 = vld [vmem:[%s1 + $0x44] sm:$0xf]
        %v364 = vld [vmem:[%s1 + $0x48] sm:$0xf]
        %v365 = vld [vmem:[%s1 + $0x4c] sm:$0xf]
        %v366 = vld [vmem:[%s1 + $0x50] sm:$0xf]
        %v367 = vld [vmem:[%s1 + $0x54] sm:$0xf]
        %v368 = vld [vmem:[%s1 + $0x58] sm:$0xf]
        %v369 = vld [vmem:[%s1 + $0x5c] sm:$0xf]
        %v370 = vld [vmem:[%s2] sm:$0x1]
        %v371 = vpack.c.bf16 %v342, %v342
        %v372 = vpack.c.bf16 %v343, %v343
        %v373 = vpack.c.bf16 %v344, %v344
        %v374 = vpack.c.bf16 %v345, %v345
        %v375 = vrot.slane %v342, 7
        %v376 = vrot.slane %v343, 7
        %v377 = vrot.slane %v344, 7
        %v378 = vrot.slane %v345, 7
        %vm379 = vcmp.lt.s32.totalorder %v314, 1
        %v380 = vsel %vm379, %v377, %v378
        %v381 = vsel %vm379, %v376, %v377
        %v382 = vsel %vm379, %v375, %v376
        %v383 = vsel %vm379, %v378, %v375
        %v384 = vsel %vm318, %v383, 0.0
        %v385 = vsel %vm319, %v382, 0.0
        %v386 = vsel %vm320, %v381, 0.0
        %v387 = vsel %vm321, %v380, 0.0
        %v388 = vpack.c.bf16 %v384, %v384
        %v389 = vpack.c.bf16 %v385, %v385
        %v390 = vpack.c.bf16 %v386, %v386
        %v391 = vpack.c.bf16 %v387, %v387
        %v392 = vrot.slane %v342, 1
        %v393 = vrot.slane %v343, 1
        %v394 = vrot.slane %v344, 1
        %v395 = vrot.slane %v345, 1
        %vm396 = vcmp.lt.s32.totalorder %v314, 7
        %v397 = vsel %vm396, %v394, %v395
        %v398 = vsel %vm396, %v393, %v394
        %v399 = vsel %vm396, %v392, %v393
        %v400 = vsel %vm396, %v395, %v392
        %v401 = vsel %vm322, %v399, 0.0
        %v402 = vsel %vm323, %v398, 0.0
        %v403 = vsel %vm324, %v397, 0.0
        %v404 = vsel %vm325, %v400, 0.0
        %v405 = vpack.c.bf16 %v401, %v401
        %v406 = vpack.c.bf16 %v402, %v402
        %v407 = vpack.c.bf16 %v403, %v403
        %v408 = vpack.c.bf16 %v404, %v404
        %v413 = vunpack.c.l.b16 %v388
        %v414 = vunpack.c.l.b16 %v389
        %v415 = vunpack.c.l.b16 %v390
        %v416 = vunpack.c.l.b16 %v391
        %v417 = vpack.c.b16 %v414, %v413
        %v418 = vpack.c.b16 %v416, %v415
        %v423 = vunpack.c.l.b16 %v371
        %v424 = vunpack.c.l.b16 %v372
        %v425 = vunpack.c.l.b16 %v373
        %v426 = vunpack.c.l.b16 %v374
        %v427 = vpack.c.b16 %v424, %v423
        %v428 = vpack.c.b16 %v426, %v425
        %429 = vrot.lane.b32.xlu0 %v427, 64
        %v430 = vpop.permute.xlu0 %429
        %431 = vrot.lane.b32.xlu0 %v428, 64
        %v432 = vpop.permute.xlu0 %431
        %v437 = vunpack.c.l.b16 %v405
        %v438 = vunpack.c.l.b16 %v406
        %v439 = vunpack.c.l.b16 %v407
        %v440 = vunpack.c.l.b16 %v408
        %v441 = vpack.c.b16 %v438, %v437
        %v442 = vpack.c.b16 %v440, %v439
        %vm443 = vcmask 523264
        %v446 = vsel %vm443, %v417, %v430
        %v450 = vsel %vm443, %v418, %v432
        %v453 = vperm.slane %v370, 0
        %v479 = vunpack.c.l.b16 %v346
        %v480 = vunpack.c.l.b16 %v347
        %v481 = vunpack.c.l.b16 %v348
        %v482 = vunpack.c.l.b16 %v349
        %v483 = vunpack.c.l.b16 %v350
        %v484 = vunpack.c.l.b16 %v351
        %v485 = vunpack.c.l.b16 %v352
        %v486 = vunpack.c.l.b16 %v353
        %v487 = vunpack.c.l.b16 %v354
        %v488 = vunpack.c.l.b16 %v355
        %v489 = vunpack.c.l.b16 %v356
        %v490 = vunpack.c.l.b16 %v357
        %v491 = vunpack.c.l.b16 %v358
        %v492 = vunpack.c.l.b16 %v359
        %v493 = vunpack.c.l.b16 %v360
        %v494 = vunpack.c.l.b16 %v361
        %v495 = vunpack.c.l.b16 %v362
        %v496 = vunpack.c.l.b16 %v363
        %v497 = vunpack.c.l.b16 %v364
        %v498 = vunpack.c.l.b16 %v365
        %v499 = vunpack.c.l.b16 %v366
        %v500 = vunpack.c.l.b16 %v367
        %v501 = vunpack.c.l.b16 %v368
        %v502 = vunpack.c.l.b16 %v369
        %v503 = vpack.c.b16 %v480, %v479
        %v504 = vpack.c.b16 %v482, %v481
        %v505 = vpack.c.b16 %v484, %v483
        %v506 = vpack.c.b16 %v486, %v485
        %v507 = vpack.c.b16 %v488, %v487
        %v508 = vpack.c.b16 %v490, %v489
        %v509 = vpack.c.b16 %v492, %v491
        %v510 = vpack.c.b16 %v494, %v493
        %v511 = vpack.c.b16 %v496, %v495
        %v512 = vpack.c.b16 %v498, %v497
        %v513 = vpack.c.b16 %v500, %v499
        %v514 = vpack.c.b16 %v502, %v501
        %v528 = vsel %vm443, %v441, 0
        %v531 = vsel %vm443, %v442, 0
        %533 = vmatpush.bf16.msra.mxu0 %v510
        %534 = vmatpush.bf16.msra.mxu0 %v509
        %535 = vmatpush.bf16.msra.mxu0 %v508
        %536 = vmatpush.bf16.msra.mxu0 %v507
        %537 = vmatpush.bf16.msra.mxu0 %v506
        %538 = vmatpush.bf16.msra.mxu0 %v505
        %539 = vmatpush.bf16.msra.mxu0 %v504
        %540 = vmatpush.bf16.msra.mxu0 %v503
        %541 = vmatmul.bf16.gmra.mxu0 %v446
        %v542 = vpop.f32.mrf.mxu0
        %v543 = vadd.f32 %v453, %v542
        %v544 = vpop.f32.mrf.mxu0
        %v545 = vadd.f32 %v453, %v544
        %546 = vmatmul.bf16.gmra.mxu0 %v450
        %v547 = vpop.f32.mrf.mxu0
        %v548 = vadd.f32 %v453, %v547
        %v549 = vpop.f32.mrf.mxu0
        %v550 = vadd.f32 %v453, %v549
        %551 = vdwg.mxu0
        %552 = vmatpush.bf16.msra.mxu0 0
        %553 = vmatpush.bf16.msra.mxu0 0
        %554 = vmatpush.bf16.msra.mxu0 0
        %555 = vmatpush.bf16.msra.mxu0 0
        %556 = vmatpush.bf16.msra.mxu0 %v514
        %557 = vmatpush.bf16.msra.mxu0 %v513
        %558 = vmatpush.bf16.msra.mxu0 %v512
        %559 = vmatpush.bf16.msra.mxu0 %v511
        %560 = vmatmul.bf16.gmra.mxu0 %v528
        %v561 = vpop.f32.mrf.mxu0
        %v562 = vadd.f32 %v543, %v561
        %v563 = vpop.f32.mrf.mxu0
        %v564 = vadd.f32 %v545, %v563
        %565 = vmatmul.bf16.gmra.mxu0 %v531
        %v566 = vpop.f32.mrf.mxu0
        %v567 = vadd.f32 %v548, %v566
        %v568 = vpop.f32.mrf.mxu0
        %v569 = vadd.f32 %v550, %v568
        %570 = vdwg.mxu0
        %v571 = vmax.f32 %v562, 0.0
        %v572 = vmax.f32 %v564, 0.0
        %v573 = vmax.f32 %v567, 0.0
        %v574 = vmax.f32 %v569, 0.0
        %v575 = vld [vmem:[%s3] sm:$0x1]
        %v576 = vld [vmem:[%s4] sm:$0x1]
        %v577 = vsel %vm443, %v571, 0.0
        %v578 = vsel %vm443, %v572, 0.0
        %v579 = vadd.f32 %v577, %v578
        %v580 = vsel %vm443, %v573, 0.0
        %v581 = vadd.f32 %v579, %v580
        %v582 = vsel %vm443, %v574, 0.0
        %v583 = vadd.f32 %v581, %v582
        %v584 = vrot.slane %v583, 4
        %v585 = vadd.f32 %v583, %v584
        %v586 = vrot.slane %v585, 2
        %v587 = vadd.f32 %v585, %v586
        %v588 = vrot.slane %v587, 1
        %v589 = vadd.f32 %v587, %v588
        %v590 = vmul.f32 %v571, %v571
        %v591 = vmul.f32 %v572, %v572
        %v592 = vmul.f32 %v573, %v573
        %v593 = vmul.f32 %v574, %v574
        %v594 = vsel %vm443, %v590, 0.0
        %v595 = vsel %vm443, %v591, 0.0
        %v596 = vadd.f32 %v594, %v595
        %v597 = vsel %vm443, %v592, 0.0
        %v598 = vadd.f32 %v596, %v597
        %v599 = vsel %vm443, %v593, 0.0
        %v600 = vadd.f32 %v598, %v599
        %v601 = vrot.slane %v600, 4
        %v602 = vadd.f32 %v600, %v601
        %v603 = vrot.slane %v602, 2
        %v604 = vadd.f32 %v602, %v603
        %v605 = vrot.slane %v604, 1
        %v606 = vadd.f32 %v604, %v605
        %v608 = vsel %vm443, %v589, 0
        %610 = vmatpush.msra.mxu0 0.0
        %611 = vmatpush.msra.mxu0 0.0
        %612 = vmatpush.msra.mxu0 0.0
        %613 = vmatpush.msra.mxu0 0.0
        %614 = vmatpush.msra.mxu0 0.0
        %615 = vmatpush.msra.mxu0 0.0
        %616 = vmatpush.msra.mxu0 0.0
        %617 = vmatpush.msra.mxu0 0.0
        %618 = vmatpush.msra.mxu0 %v312
        %619 = vmatpush.msra.mxu0 %v311
        %620 = vmatpush.msra.mxu0 %v310
        %621 = vmatpush.msra.mxu0 %v309
        %622 = vmatpush.msra.mxu0 %v308
        %623 = vmatpush.msra.mxu0 %v307
        %624 = vmatpush.msra.mxu0 %v306
        %625 = vmatpush.msra.mxu0 %v305
        %626 = vmatmul.f32.gmra.mxu0 %v608
        %v627 = vpop.f32.mrf.mxu0
        %v628 = vadd.f32 0.0, %v627
        %629 = vdwg.mxu0
        %v630 = vmul.f32 %v628, 0.00390625
        %v632 = vsel %vm443, %v606, 0
        %634 = vmatpush.msra.mxu0 0.0
        %635 = vmatpush.msra.mxu0 0.0
        %636 = vmatpush.msra.mxu0 0.0
        %637 = vmatpush.msra.mxu0 0.0
        %638 = vmatpush.msra.mxu0 0.0
        %639 = vmatpush.msra.mxu0 0.0
        %640 = vmatpush.msra.mxu0 0.0
        %641 = vmatpush.msra.mxu0 0.0
        %642 = vmatpush.msra.mxu0 %v312
        %643 = vmatpush.msra.mxu0 %v311
        %644 = vmatpush.msra.mxu0 %v310
        %645 = vmatpush.msra.mxu0 %v309
        %646 = vmatpush.msra.mxu0 %v308
        %647 = vmatpush.msra.mxu0 %v307
        %648 = vmatpush.msra.mxu0 %v306
        %649 = vmatpush.msra.mxu0 %v305
        %650 = vmatmul.f32.gmra.mxu0 %v632
        %v651 = vpop.f32.mrf.mxu0
        %v652 = vadd.f32 0.0, %v651
        %653 = vdwg.mxu0
        %v654 = vmul.f32 %v652, 0.00390625
        %v655 = vmul.f32 %v630, %v630
        %v656 = vsub.f32 %v654, %v655
        %v657 = vmax.f32 %v656, 0.0
        %v658 = vadd.f32 %v657, 1e-05
        %v659 = vrsqrt.pop %v658
        %v660 = vmul.f32 %v659, %v658
        %v661 = vmul.f32 %v660, %v659
        %v662 = vmul.f32 0.5, %v661
        %v663 = vsub.f32 1.5, %v662
        %v664 = vmul.f32 %v659, %v663
        %vm665 = vweird.f32 %v658
        %vm666 = vweird.f32 %v659
        %vm667 = vmor %vm665, %vm666
        %v668 = vsel %vm667, %v659, %v664
        %v669 = vperm.slane %v630, 0
        %v670 = vsub.f32 %v571, %v669
        %v671 = vsub.f32 %v572, %v669
        %v672 = vsub.f32 %v573, %v669
        %v673 = vsub.f32 %v574, %v669
        %v674 = vperm.slane %v668, 0
        %v675 = vmul.f32 %v670, %v674
        %v676 = vmul.f32 %v671, %v674
        %v677 = vmul.f32 %v672, %v674
        %v678 = vmul.f32 %v673, %v674
        %v680 = vperm.slane %v575, 0
        %v682 = vmul.f32 %v675, %v680
        %v683 = vmul.f32 %v676, %v680
        %v684 = vmul.f32 %v677, %v680
        %v685 = vmul.f32 %v678, %v680
        %v687 = vperm.slane %v576, 0
        %v689 = vadd.f32 %v682, %v687
        %v690 = vadd.f32 %v683, %v687
        %v691 = vadd.f32 %v684, %v687
        %v692 = vadd.f32 %v685, %v687
        %v693 = vld [vmem:[%s5] sm:$0xf]
        %v694 = vld [vmem:[%s5 + $0x4] sm:$0xf]
        %v695 = vld [vmem:[%s5 + $0x8] sm:$0xf]
        %v696 = vld [vmem:[%s5 + $0xc] sm:$0xf]
        %v697 = vld [vmem:[%s5 + $0x10] sm:$0xf]
        %v698 = vld [vmem:[%s5 + $0x14] sm:$0xf]
        %v699 = vld [vmem:[%s5 + $0x18] sm:$0xf]
        %v700 = vld [vmem:[%s5 + $0x1c] sm:$0xf]
        %v701 = vld [vmem:[%s5 + $0x20] sm:$0xf]
        %v702 = vld [vmem:[%s5 + $0x24] sm:$0xf]
        %v703 = vld [vmem:[%s5 + $0x28] sm:$0xf]
        %v704 = vld [vmem:[%s5 + $0x2c] sm:$0xf]
        %v705 = vld [vmem:[%s5 + $0x30] sm:$0xf]
        %v706 = vld [vmem:[%s5 + $0x34] sm:$0xf]
        %v707 = vld [vmem:[%s5 + $0x38] sm:$0xf]
        %v708 = vld [vmem:[%s5 + $0x3c] sm:$0xf]
        %v709 = vld [vmem:[%s5 + $0x40] sm:$0xf]
        %v710 = vld [vmem:[%s5 + $0x44] sm:$0xf]
        %v711 = vld [vmem:[%s5 + $0x48] sm:$0xf]
        %v712 = vld [vmem:[%s5 + $0x4c] sm:$0xf]
        %v713 = vld [vmem:[%s5 + $0x50] sm:$0xf]
        %v714 = vld [vmem:[%s5 + $0x54] sm:$0xf]
        %v715 = vld [vmem:[%s5 + $0x58] sm:$0xf]
        %v716 = vld [vmem:[%s5 + $0x5c] sm:$0xf]
        %v717 = vld [vmem:[%s6] sm:$0x1]
        %v718 = vpack.c.bf16 %v689, %v689
        %v719 = vpack.c.bf16 %v690, %v690
        %v720 = vpack.c.bf16 %v691, %v691
        %v721 = vpack.c.bf16 %v692, %v692
        %v722 = vrot.slane %v689, 7
        %v723 = vrot.slane %v690, 7
        %v724 = vrot.slane %v691, 7
        %v725 = vrot.slane %v692, 7
        %v726 = vsel %vm379, %v724, %v725
        %v727 = vsel %vm379, %v723, %v724
        %v728 = vsel %vm379, %v722, %v723
        %v729 = vsel %vm379, %v725, %v722
        %v730 = vsel %vm318, %v729, 0.0
        %v731 = vsel %vm319, %v728, 0.0
        %v732 = vsel %vm320, %v727, 0.0
        %v733 = vsel %vm321, %v726, 0.0
        %v734 = vpack.c.bf16 %v730, %v730
        %v735 = vpack.c.bf16 %v731, %v731
        %v736 = vpack.c.bf16 %v732, %v732
        %v737 = vpack.c.bf16 %v733, %v733
        %v738 = vrot.slane %v689, 1
        %v739 = vrot.slane %v690, 1
        %v740 = vrot.slane %v691, 1
        %v741 = vrot.slane %v692, 1
        %v742 = vsel %vm396, %v740, %v741
        %v743 = vsel %vm396, %v739, %v740
        %v744 = vsel %vm396, %v738, %v739
        %v745 = vsel %vm396, %v741, %v738
        %v746 = vsel %vm322, %v744, 0.0
        %v747 = vsel %vm323, %v743, 0.0
        %v748 = vsel %vm324, %v742, 0.0
        %v749 = vsel %vm325, %v745, 0.0
        %v750 = vpack.c.bf16 %v746, %v746
        %v751 = vpack.c.bf16 %v747, %v747
        %v752 = vpack.c.bf16 %v748, %v748
        %v753 = vpack.c.bf16 %v749, %v749
        %v758 = vunpack.c.l.b16 %v734
        %v759 = vunpack.c.l.b16 %v735
        %v760 = vunpack.c.l.b16 %v736
        %v761 = vunpack.c.l.b16 %v737
        %v762 = vpack.c.b16 %v759, %v758
        %v763 = vpack.c.b16 %v761, %v760
        %v768 = vunpack.c.l.b16 %v718
        %v769 = vunpack.c.l.b16 %v719
        %v770 = vunpack.c.l.b16 %v720
        %v771 = vunpack.c.l.b16 %v721
        %v772 = vpack.c.b16 %v769, %v768
        %v773 = vpack.c.b16 %v771, %v770
        %774 = vrot.lane.b32.xlu0 %v772, 64
        %v775 = vpop.permute.xlu0 %774
        %776 = vrot.lane.b32.xlu0 %v773, 64
        %v777 = vpop.permute.xlu0 %776
        %v782 = vunpack.c.l.b16 %v750
        %v783 = vunpack.c.l.b16 %v751
        %v784 = vunpack.c.l.b16 %v752
        %v785 = vunpack.c.l.b16 %v753
        %v786 = vpack.c.b16 %v783, %v782
        %v787 = vpack.c.b16 %v785, %v784
        %v790 = vsel %vm443, %v762, %v775
        %v794 = vsel %vm443, %v763, %v777
        %v797 = vperm.slane %v717, 0
        %v823 = vunpack.c.l.b16 %v693
        %v824 = vunpack.c.l.b16 %v694
        %v825 = vunpack.c.l.b16 %v695
        %v826 = vunpack.c.l.b16 %v696
        %v827 = vunpack.c.l.b16 %v697
        %v828 = vunpack.c.l.b16 %v698
        %v829 = vunpack.c.l.b16 %v699
        %v830 = vunpack.c.l.b16 %v700
        %v831 = vunpack.c.l.b16 %v701
        %v832 = vunpack.c.l.b16 %v702
        %v833 = vunpack.c.l.b16 %v703
        %v834 = vunpack.c.l.b16 %v704
        %v835 = vunpack.c.l.b16 %v705
        %v836 = vunpack.c.l.b16 %v706
        %v837 = vunpack.c.l.b16 %v707
        %v838 = vunpack.c.l.b16 %v708
        %v839 = vunpack.c.l.b16 %v709
        %v840 = vunpack.c.l.b16 %v710
        %v841 = vunpack.c.l.b16 %v711
        %v842 = vunpack.c.l.b16 %v712
        %v843 = vunpack.c.l.b16 %v713
        %v844 = vunpack.c.l.b16 %v714
        %v845 = vunpack.c.l.b16 %v715
        %v846 = vunpack.c.l.b16 %v716
        %v847 = vpack.c.b16 %v824, %v823
        %v848 = vpack.c.b16 %v826, %v825
        %v849 = vpack.c.b16 %v828, %v827
        %v850 = vpack.c.b16 %v830, %v829
        %v851 = vpack.c.b16 %v832, %v831
        %v852 = vpack.c.b16 %v834, %v833
        %v853 = vpack.c.b16 %v836, %v835
        %v854 = vpack.c.b16 %v838, %v837
        %v855 = vpack.c.b16 %v840, %v839
        %v856 = vpack.c.b16 %v842, %v841
        %v857 = vpack.c.b16 %v844, %v843
        %v858 = vpack.c.b16 %v846, %v845
        %v872 = vsel %vm443, %v786, 0
        %v875 = vsel %vm443, %v787, 0
        %877 = vmatpush.bf16.msra.mxu0 %v854
        %878 = vmatpush.bf16.msra.mxu0 %v853
        %879 = vmatpush.bf16.msra.mxu0 %v852
        %880 = vmatpush.bf16.msra.mxu0 %v851
        %881 = vmatpush.bf16.msra.mxu0 %v850
        %882 = vmatpush.bf16.msra.mxu0 %v849
        %883 = vmatpush.bf16.msra.mxu0 %v848
        %884 = vmatpush.bf16.msra.mxu0 %v847
        %885 = vmatmul.bf16.gmra.mxu0 %v790
        %v886 = vpop.f32.mrf.mxu0
        %v887 = vadd.f32 %v797, %v886
        %v888 = vpop.f32.mrf.mxu0
        %v889 = vadd.f32 %v797, %v888
        %890 = vmatmul.bf16.gmra.mxu0 %v794
        %v891 = vpop.f32.mrf.mxu0
        %v892 = vadd.f32 %v797, %v891
        %v893 = vpop.f32.mrf.mxu0
        %v894 = vadd.f32 %v797, %v893
        %895 = vdwg.mxu0
        %896 = vmatpush.bf16.msra.mxu0 0
        %897 = vmatpush.bf16.msra.mxu0 0
        %898 = vmatpush.bf16.msra.mxu0 0
        %899 = vmatpush.bf16.msra.mxu0 0
        %900 = vmatpush.bf16.msra.mxu0 %v858
        %901 = vmatpush.bf16.msra.mxu0 %v857
        %902 = vmatpush.bf16.msra.mxu0 %v856
        %903 = vmatpush.bf16.msra.mxu0 %v855
        %904 = vmatmul.bf16.gmra.mxu0 %v872
        %v905 = vpop.f32.mrf.mxu0
        %v906 = vadd.f32 %v887, %v905
        %v907 = vpop.f32.mrf.mxu0
        %v908 = vadd.f32 %v889, %v907
        %909 = vmatmul.bf16.gmra.mxu0 %v875
        %v910 = vpop.f32.mrf.mxu0
        %v911 = vadd.f32 %v892, %v910
        %v912 = vpop.f32.mrf.mxu0
        %v913 = vadd.f32 %v894, %v912
        %914 = vdwg.mxu0
        %v915 = vmax.f32 %v906, 0.0
        %v916 = vmax.f32 %v908, 0.0
        %v917 = vmax.f32 %v911, 0.0
        %v918 = vmax.f32 %v913, 0.0
        %v919 = vadd.f32 %v915, %v342
        %v920 = vadd.f32 %v916, %v343
        %v921 = vadd.f32 %v917, %v344
        %v922 = vadd.f32 %v918, %v345
        %s923 = scalar_lea.vmem %s1, 96
        %v924 = vld [vmem:[%s923] sm:$0xf]
        %v925 = vld [vmem:[%s923 + $0x4] sm:$0xf]
        %v926 = vld [vmem:[%s923 + $0x8] sm:$0xf]
        %v927 = vld [vmem:[%s923 + $0xc] sm:$0xf]
        %v928 = vld [vmem:[%s923 + $0x10] sm:$0xf]
        %v929 = vld [vmem:[%s923 + $0x14] sm:$0xf]
        %v930 = vld [vmem:[%s923 + $0x18] sm:$0xf]
        %v931 = vld [vmem:[%s923 + $0x1c] sm:$0xf]
        %v932 = vld [vmem:[%s923 + $0x20] sm:$0xf]
        %v933 = vld [vmem:[%s923 + $0x24] sm:$0xf]
        %v934 = vld [vmem:[%s923 + $0x28] sm:$0xf]
        %v935 = vld [vmem:[%s923 + $0x2c] sm:$0xf]
        %v936 = vld [vmem:[%s923 + $0x30] sm:$0xf]
        %v937 = vld [vmem:[%s923 + $0x34] sm:$0xf]
        %v938 = vld [vmem:[%s923 + $0x38] sm:$0xf]
        %v939 = vld [vmem:[%s923 + $0x3c] sm:$0xf]
        %v940 = vld [vmem:[%s923 + $0x40] sm:$0xf]
        %v941 = vld [vmem:[%s923 + $0x44] sm:$0xf]
        %v942 = vld [vmem:[%s923 + $0x48] sm:$0xf]
        %v943 = vld [vmem:[%s923 + $0x4c] sm:$0xf]
        %v944 = vld [vmem:[%s923 + $0x50] sm:$0xf]
        %v945 = vld [vmem:[%s923 + $0x54] sm:$0xf]
        %v946 = vld [vmem:[%s923 + $0x58] sm:$0xf]
        %v947 = vld [vmem:[%s923 + $0x5c] sm:$0xf]
        %s948 = scalar_lea.vmem %s2, 1
        %v949 = vld [vmem:[%s948] sm:$0x1]
        %v950 = vpack.c.bf16 %v919, %v919
        %v951 = vpack.c.bf16 %v920, %v920
        %v952 = vpack.c.bf16 %v921, %v921
        %v953 = vpack.c.bf16 %v922, %v922
        %v954 = vrot.slane %v919, 5
        %v955 = vrot.slane %v920, 5
        %v956 = vrot.slane %v921, 5
        %v957 = vrot.slane %v922, 5
        %vm958 = vcmp.lt.s32.totalorder %v314, 3
        %v959 = vsel %vm958, %v956, %v957
        %v960 = vsel %vm958, %v955, %v956
        %v961 = vsel %vm958, %v954, %v955
        %v962 = vsel %vm958, %v957, %v954
        %v963 = vsel %vm326, %v962, 0.0
        %v964 = vsel %vm327, %v961, 0.0
        %v965 = vsel %vm328, %v960, 0.0
        %v966 = vsel %vm329, %v959, 0.0
        %v967 = vpack.c.bf16 %v963, %v963
        %v968 = vpack.c.bf16 %v964, %v964
        %v969 = vpack.c.bf16 %v965, %v965
        %v970 = vpack.c.bf16 %v966, %v966
        %v971 = vrot.slane %v919, 3
        %v972 = vrot.slane %v920, 3
        %v973 = vrot.slane %v921, 3
        %v974 = vrot.slane %v922, 3
        %vm975 = vcmp.lt.s32.totalorder %v314, 5
        %v976 = vsel %vm975, %v973, %v974
        %v977 = vsel %vm975, %v972, %v973
        %v978 = vsel %vm975, %v971, %v972
        %v979 = vsel %vm975, %v974, %v971
        %v980 = vsel %vm330, %v978, 0.0
        %v981 = vsel %vm331, %v977, 0.0
        %v982 = vsel %vm332, %v976, 0.0
        %v983 = vsel %vm333, %v979, 0.0
        %v984 = vpack.c.bf16 %v980, %v980
        %v985 = vpack.c.bf16 %v981, %v981
        %v986 = vpack.c.bf16 %v982, %v982
        %v987 = vpack.c.bf16 %v983, %v983
        %v992 = vunpack.c.l.b16 %v967
        %v993 = vunpack.c.l.b16 %v968
        %v994 = vunpack.c.l.b16 %v969
        %v995 = vunpack.c.l.b16 %v970
        %v996 = vpack.c.b16 %v993, %v992
        %v997 = vpack.c.b16 %v995, %v994
        %v1002 = vunpack.c.l.b16 %v950
        %v1003 = vunpack.c.l.b16 %v951
        %v1004 = vunpack.c.l.b16 %v952
        %v1005 = vunpack.c.l.b16 %v953
        %v1006 = vpack.c.b16 %v1003, %v1002
        %v1007 = vpack.c.b16 %v1005, %v1004
        %1008 = vrot.lane.b32.xlu0 %v1006, 64
        %v1009 = vpop.permute.xlu0 %1008
        %1010 = vrot.lane.b32.xlu0 %v1007, 64
        %v1011 = vpop.permute.xlu0 %1010
        %v1016 = vunpack.c.l.b16 %v984
        %v1017 = vunpack.c.l.b16 %v985
        %v1018 = vunpack.c.l.b16 %v986
        %v1019 = vunpack.c.l.b16 %v987
        %v1020 = vpack.c.b16 %v1017, %v1016
        %v1021 = vpack.c.b16 %v1019, %v1018
        %v1024 = vsel %vm443, %v996, %v1009
        %v1028 = vsel %vm443, %v997, %v1011
        %v1031 = vperm.slane %v949, 0
        %v1057 = vunpack.c.l.b16 %v924
        %v1058 = vunpack.c.l.b16 %v925
        %v1059 = vunpack.c.l.b16 %v926
        %v1060 = vunpack.c.l.b16 %v927
        %v1061 = vunpack.c.l.b16 %v928
        %v1062 = vunpack.c.l.b16 %v929
        %v1063 = vunpack.c.l.b16 %v930
        %v1064 = vunpack.c.l.b16 %v931
        %v1065 = vunpack.c.l.b16 %v932
        %v1066 = vunpack.c.l.b16 %v933
        %v1067 = vunpack.c.l.b16 %v934
        %v1068 = vunpack.c.l.b16 %v935
        %v1069 = vunpack.c.l.b16 %v936
        %v1070 = vunpack.c.l.b16 %v937
        %v1071 = vunpack.c.l.b16 %v938
        %v1072 = vunpack.c.l.b16 %v939
        %v1073 = vunpack.c.l.b16 %v940
        %v1074 = vunpack.c.l.b16 %v941
        %v1075 = vunpack.c.l.b16 %v942
        %v1076 = vunpack.c.l.b16 %v943
        %v1077 = vunpack.c.l.b16 %v944
        %v1078 = vunpack.c.l.b16 %v945
        %v1079 = vunpack.c.l.b16 %v946
        %v1080 = vunpack.c.l.b16 %v947
        %v1081 = vpack.c.b16 %v1058, %v1057
        %v1082 = vpack.c.b16 %v1060, %v1059
        %v1083 = vpack.c.b16 %v1062, %v1061
        %v1084 = vpack.c.b16 %v1064, %v1063
        %v1085 = vpack.c.b16 %v1066, %v1065
        %v1086 = vpack.c.b16 %v1068, %v1067
        %v1087 = vpack.c.b16 %v1070, %v1069
        %v1088 = vpack.c.b16 %v1072, %v1071
        %v1089 = vpack.c.b16 %v1074, %v1073
        %v1090 = vpack.c.b16 %v1076, %v1075
        %v1091 = vpack.c.b16 %v1078, %v1077
        %v1092 = vpack.c.b16 %v1080, %v1079
        %v1106 = vsel %vm443, %v1020, 0
        %v1109 = vsel %vm443, %v1021, 0
        %1111 = vmatpush.bf16.msra.mxu0 %v1088
        %1112 = vmatpush.bf16.msra.mxu0 %v1087
        %1113 = vmatpush.bf16.msra.mxu0 %v1086
        %1114 = vmatpush.bf16.msra.mxu0 %v1085
        %1115 = vmatpush.bf16.msra.mxu0 %v1084
        %1116 = vmatpush.bf16.msra.mxu0 %v1083
        %1117 = vmatpush.bf16.msra.mxu0 %v1082
        %1118 = vmatpush.bf16.msra.mxu0 %v1081
        %1119 = vmatmul.bf16.gmra.mxu0 %v1024
        %v1120 = vpop.f32.mrf.mxu0
        %v1121 = vadd.f32 %v1031, %v1120
        %v1122 = vpop.f32.mrf.mxu0
        %v1123 = vadd.f32 %v1031, %v1122
        %1124 = vmatmul.bf16.gmra.mxu0 %v1028
        %v1125 = vpop.f32.mrf.mxu0
        %v1126 = vadd.f32 %v1031, %v1125
        %v1127 = vpop.f32.mrf.mxu0
        %v1128 = vadd.f32 %v1031, %v1127
        %1129 = vdwg.mxu0
        %1130 = vmatpush.bf16.msra.mxu0 0
        %1131 = vmatpush.bf16.msra.mxu0 0
        %1132 = vmatpush.bf16.msra.mxu0 0
        %1133 = vmatpush.bf16.msra.mxu0 0
        %1134 = vmatpush.bf16.msra.mxu0 %v1092
        %1135 = vmatpush.bf16.msra.mxu0 %v1091
        %1136 = vmatpush.bf16.msra.mxu0 %v1090
        %1137 = vmatpush.bf16.msra.mxu0 %v1089
        %1138 = vmatmul.bf16.gmra.mxu0 %v1106
        %v1139 = vpop.f32.mrf.mxu0
        %v1140 = vadd.f32 %v1121, %v1139
        %v1141 = vpop.f32.mrf.mxu0
        %v1142 = vadd.f32 %v1123, %v1141
        %1143 = vmatmul.bf16.gmra.mxu0 %v1109
        %v1144 = vpop.f32.mrf.mxu0
        %v1145 = vadd.f32 %v1126, %v1144
        %v1146 = vpop.f32.mrf.mxu0
        %v1147 = vadd.f32 %v1128, %v1146
        %1148 = vdwg.mxu0
        %v1149 = vmax.f32 %v1140, 0.0
        %v1150 = vmax.f32 %v1142, 0.0
        %v1151 = vmax.f32 %v1145, 0.0
        %v1152 = vmax.f32 %v1147, 0.0
        %s1153 = scalar_lea.vmem %s3, 1
        %v1154 = vld [vmem:[%s1153] sm:$0x1]
        %s1155 = scalar_lea.vmem %s4, 1
        %v1156 = vld [vmem:[%s1155] sm:$0x1]
        %v1157 = vsel %vm443, %v1149, 0.0
        %v1158 = vsel %vm443, %v1150, 0.0
        %v1159 = vadd.f32 %v1157, %v1158
        %v1160 = vsel %vm443, %v1151, 0.0
        %v1161 = vadd.f32 %v1159, %v1160
        %v1162 = vsel %vm443, %v1152, 0.0
        %v1163 = vadd.f32 %v1161, %v1162
        %v1164 = vrot.slane %v1163, 4
        %v1165 = vadd.f32 %v1163, %v1164
        %v1166 = vrot.slane %v1165, 2
        %v1167 = vadd.f32 %v1165, %v1166
        %v1168 = vrot.slane %v1167, 1
        %v1169 = vadd.f32 %v1167, %v1168
        %v1170 = vmul.f32 %v1149, %v1149
        %v1171 = vmul.f32 %v1150, %v1150
        %v1172 = vmul.f32 %v1151, %v1151
        %v1173 = vmul.f32 %v1152, %v1152
        %v1174 = vsel %vm443, %v1170, 0.0
        %v1175 = vsel %vm443, %v1171, 0.0
        %v1176 = vadd.f32 %v1174, %v1175
        %v1177 = vsel %vm443, %v1172, 0.0
        %v1178 = vadd.f32 %v1176, %v1177
        %v1179 = vsel %vm443, %v1173, 0.0
        %v1180 = vadd.f32 %v1178, %v1179
        %v1181 = vrot.slane %v1180, 4
        %v1182 = vadd.f32 %v1180, %v1181
        %v1183 = vrot.slane %v1182, 2
        %v1184 = vadd.f32 %v1182, %v1183
        %v1185 = vrot.slane %v1184, 1
        %v1186 = vadd.f32 %v1184, %v1185
        %v1188 = vsel %vm443, %v1169, 0
        %1190 = vmatpush.msra.mxu0 0.0
        %1191 = vmatpush.msra.mxu0 0.0
        %1192 = vmatpush.msra.mxu0 0.0
        %1193 = vmatpush.msra.mxu0 0.0
        %1194 = vmatpush.msra.mxu0 0.0
        %1195 = vmatpush.msra.mxu0 0.0
        %1196 = vmatpush.msra.mxu0 0.0
        %1197 = vmatpush.msra.mxu0 0.0
        %1198 = vmatpush.msra.mxu0 %v312
        %1199 = vmatpush.msra.mxu0 %v311
        %1200 = vmatpush.msra.mxu0 %v310
        %1201 = vmatpush.msra.mxu0 %v309
        %1202 = vmatpush.msra.mxu0 %v308
        %1203 = vmatpush.msra.mxu0 %v307
        %1204 = vmatpush.msra.mxu0 %v306
        %1205 = vmatpush.msra.mxu0 %v305
        %1206 = vmatmul.f32.gmra.mxu0 %v1188
        %v1207 = vpop.f32.mrf.mxu0
        %v1208 = vadd.f32 0.0, %v1207
        %1209 = vdwg.mxu0
        %v1210 = vmul.f32 %v1208, 0.00390625
        %v1212 = vsel %vm443, %v1186, 0
        %1214 = vmatpush.msra.mxu0 0.0
        %1215 = vmatpush.msra.mxu0 0.0
        %1216 = vmatpush.msra.mxu0 0.0
        %1217 = vmatpush.msra.mxu0 0.0
        %1218 = vmatpush.msra.mxu0 0.0
        %1219 = vmatpush.msra.mxu0 0.0
        %1220 = vmatpush.msra.mxu0 0.0
        %1221 = vmatpush.msra.mxu0 0.0
        %1222 = vmatpush.msra.mxu0 %v312
        %1223 = vmatpush.msra.mxu0 %v311
        %1224 = vmatpush.msra.mxu0 %v310
        %1225 = vmatpush.msra.mxu0 %v309
        %1226 = vmatpush.msra.mxu0 %v308
        %1227 = vmatpush.msra.mxu0 %v307
        %1228 = vmatpush.msra.mxu0 %v306
        %1229 = vmatpush.msra.mxu0 %v305
        %1230 = vmatmul.f32.gmra.mxu0 %v1212
        %v1231 = vpop.f32.mrf.mxu0
        %v1232 = vadd.f32 0.0, %v1231
        %1233 = vdwg.mxu0
        %v1234 = vmul.f32 %v1232, 0.00390625
        %v1235 = vmul.f32 %v1210, %v1210
        %v1236 = vsub.f32 %v1234, %v1235
        %v1237 = vmax.f32 %v1236, 0.0
        %v1238 = vadd.f32 %v1237, 1e-05
        %v1239 = vrsqrt.pop %v1238
        %v1240 = vmul.f32 %v1239, %v1238
        %v1241 = vmul.f32 %v1240, %v1239
        %v1242 = vmul.f32 0.5, %v1241
        %v1243 = vsub.f32 1.5, %v1242
        %v1244 = vmul.f32 %v1239, %v1243
        %vm1245 = vweird.f32 %v1238
        %vm1246 = vweird.f32 %v1239
        %vm1247 = vmor %vm1245, %vm1246
        %v1248 = vsel %vm1247, %v1239, %v1244
        %v1249 = vperm.slane %v1210, 0
        %v1250 = vsub.f32 %v1149, %v1249
        %v1251 = vsub.f32 %v1150, %v1249
        %v1252 = vsub.f32 %v1151, %v1249
        %v1253 = vsub.f32 %v1152, %v1249
        %v1254 = vperm.slane %v1248, 0
        %v1255 = vmul.f32 %v1250, %v1254
        %v1256 = vmul.f32 %v1251, %v1254
        %v1257 = vmul.f32 %v1252, %v1254
        %v1258 = vmul.f32 %v1253, %v1254
        %v1260 = vperm.slane %v1154, 0
        %v1262 = vmul.f32 %v1255, %v1260
        %v1263 = vmul.f32 %v1256, %v1260
        %v1264 = vmul.f32 %v1257, %v1260
        %v1265 = vmul.f32 %v1258, %v1260
        %v1267 = vperm.slane %v1156, 0
        %v1269 = vadd.f32 %v1262, %v1267
        %v1270 = vadd.f32 %v1263, %v1267
        %v1271 = vadd.f32 %v1264, %v1267
        %v1272 = vadd.f32 %v1265, %v1267
        %s1273 = scalar_lea.vmem %s5, 96
        %v1274 = vld [vmem:[%s1273] sm:$0xf]
        %v1275 = vld [vmem:[%s1273 + $0x4] sm:$0xf]
        %v1276 = vld [vmem:[%s1273 + $0x8] sm:$0xf]
        %v1277 = vld [vmem:[%s1273 + $0xc] sm:$0xf]
        %v1278 = vld [vmem:[%s1273 + $0x10] sm:$0xf]
        %v1279 = vld [vmem:[%s1273 + $0x14] sm:$0xf]
        %v1280 = vld [vmem:[%s1273 + $0x18] sm:$0xf]
        %v1281 = vld [vmem:[%s1273 + $0x1c] sm:$0xf]
        %v1282 = vld [vmem:[%s1273 + $0x20] sm:$0xf]
        %v1283 = vld [vmem:[%s1273 + $0x24] sm:$0xf]
        %v1284 = vld [vmem:[%s1273 + $0x28] sm:$0xf]
        %v1285 = vld [vmem:[%s1273 + $0x2c] sm:$0xf]
        %v1286 = vld [vmem:[%s1273 + $0x30] sm:$0xf]
        %v1287 = vld [vmem:[%s1273 + $0x34] sm:$0xf]
        %v1288 = vld [vmem:[%s1273 + $0x38] sm:$0xf]
        %v1289 = vld [vmem:[%s1273 + $0x3c] sm:$0xf]
        %v1290 = vld [vmem:[%s1273 + $0x40] sm:$0xf]
        %v1291 = vld [vmem:[%s1273 + $0x44] sm:$0xf]
        %v1292 = vld [vmem:[%s1273 + $0x48] sm:$0xf]
        %v1293 = vld [vmem:[%s1273 + $0x4c] sm:$0xf]
        %v1294 = vld [vmem:[%s1273 + $0x50] sm:$0xf]
        %v1295 = vld [vmem:[%s1273 + $0x54] sm:$0xf]
        %v1296 = vld [vmem:[%s1273 + $0x58] sm:$0xf]
        %v1297 = vld [vmem:[%s1273 + $0x5c] sm:$0xf]
        %s1298 = scalar_lea.vmem %s6, 1
        %v1299 = vld [vmem:[%s1298] sm:$0x1]
        %v1300 = vpack.c.bf16 %v1269, %v1269
        %v1301 = vpack.c.bf16 %v1270, %v1270
        %v1302 = vpack.c.bf16 %v1271, %v1271
        %v1303 = vpack.c.bf16 %v1272, %v1272
        %v1304 = vrot.slane %v1269, 7
        %v1305 = vrot.slane %v1270, 7
        %v1306 = vrot.slane %v1271, 7
        %v1307 = vrot.slane %v1272, 7
        %v1308 = vsel %vm379, %v1306, %v1307
        %v1309 = vsel %vm379, %v1305, %v1306
        %v1310 = vsel %vm379, %v1304, %v1305
        %v1311 = vsel %vm379, %v1307, %v1304
        %v1312 = vsel %vm318, %v1311, 0.0
        %v1313 = vsel %vm319, %v1310, 0.0
        %v1314 = vsel %vm320, %v1309, 0.0
        %v1315 = vsel %vm321, %v1308, 0.0
        %v1316 = vpack.c.bf16 %v1312, %v1312
        %v1317 = vpack.c.bf16 %v1313, %v1313
        %v1318 = vpack.c.bf16 %v1314, %v1314
        %v1319 = vpack.c.bf16 %v1315, %v1315
        %v1320 = vrot.slane %v1269, 1
        %v1321 = vrot.slane %v1270, 1
        %v1322 = vrot.slane %v1271, 1
        %v1323 = vrot.slane %v1272, 1
        %v1324 = vsel %vm396, %v1322, %v1323
        %v1325 = vsel %vm396, %v1321, %v1322
        %v1326 = vsel %vm396, %v1320, %v1321
        %v1327 = vsel %vm396, %v1323, %v1320
        %v1328 = vsel %vm322, %v1326, 0.0
        %v1329 = vsel %vm323, %v1325, 0.0
        %v1330 = vsel %vm324, %v1324, 0.0
        %v1331 = vsel %vm325, %v1327, 0.0
        %v1332 = vpack.c.bf16 %v1328, %v1328
        %v1333 = vpack.c.bf16 %v1329, %v1329
        %v1334 = vpack.c.bf16 %v1330, %v1330
        %v1335 = vpack.c.bf16 %v1331, %v1331
        %v1340 = vunpack.c.l.b16 %v1316
        %v1341 = vunpack.c.l.b16 %v1317
        %v1342 = vunpack.c.l.b16 %v1318
        %v1343 = vunpack.c.l.b16 %v1319
        %v1344 = vpack.c.b16 %v1341, %v1340
        %v1345 = vpack.c.b16 %v1343, %v1342
        %v1350 = vunpack.c.l.b16 %v1300
        %v1351 = vunpack.c.l.b16 %v1301
        %v1352 = vunpack.c.l.b16 %v1302
        %v1353 = vunpack.c.l.b16 %v1303
        %v1354 = vpack.c.b16 %v1351, %v1350
        %v1355 = vpack.c.b16 %v1353, %v1352
        %1356 = vrot.lane.b32.xlu0 %v1354, 64
        %v1357 = vpop.permute.xlu0 %1356
        %1358 = vrot.lane.b32.xlu0 %v1355, 64
        %v1359 = vpop.permute.xlu0 %1358
        %v1364 = vunpack.c.l.b16 %v1332
        %v1365 = vunpack.c.l.b16 %v1333
        %v1366 = vunpack.c.l.b16 %v1334
        %v1367 = vunpack.c.l.b16 %v1335
        %v1368 = vpack.c.b16 %v1365, %v1364
        %v1369 = vpack.c.b16 %v1367, %v1366
        %v1372 = vsel %vm443, %v1344, %v1357
        %v1376 = vsel %vm443, %v1345, %v1359
        %v1379 = vperm.slane %v1299, 0
        %v1405 = vunpack.c.l.b16 %v1274
        %v1406 = vunpack.c.l.b16 %v1275
        %v1407 = vunpack.c.l.b16 %v1276
        %v1408 = vunpack.c.l.b16 %v1277
        %v1409 = vunpack.c.l.b16 %v1278
        %v1410 = vunpack.c.l.b16 %v1279
        %v1411 = vunpack.c.l.b16 %v1280
        %v1412 = vunpack.c.l.b16 %v1281
        %v1413 = vunpack.c.l.b16 %v1282
        %v1414 = vunpack.c.l.b16 %v1283
        %v1415 = vunpack.c.l.b16 %v1284
        %v1416 = vunpack.c.l.b16 %v1285
        %v1417 = vunpack.c.l.b16 %v1286
        %v1418 = vunpack.c.l.b16 %v1287
        %v1419 = vunpack.c.l.b16 %v1288
        %v1420 = vunpack.c.l.b16 %v1289
        %v1421 = vunpack.c.l.b16 %v1290
        %v1422 = vunpack.c.l.b16 %v1291
        %v1423 = vunpack.c.l.b16 %v1292
        %v1424 = vunpack.c.l.b16 %v1293
        %v1425 = vunpack.c.l.b16 %v1294
        %v1426 = vunpack.c.l.b16 %v1295
        %v1427 = vunpack.c.l.b16 %v1296
        %v1428 = vunpack.c.l.b16 %v1297
        %v1429 = vpack.c.b16 %v1406, %v1405
        %v1430 = vpack.c.b16 %v1408, %v1407
        %v1431 = vpack.c.b16 %v1410, %v1409
        %v1432 = vpack.c.b16 %v1412, %v1411
        %v1433 = vpack.c.b16 %v1414, %v1413
        %v1434 = vpack.c.b16 %v1416, %v1415
        %v1435 = vpack.c.b16 %v1418, %v1417
        %v1436 = vpack.c.b16 %v1420, %v1419
        %v1437 = vpack.c.b16 %v1422, %v1421
        %v1438 = vpack.c.b16 %v1424, %v1423
        %v1439 = vpack.c.b16 %v1426, %v1425
        %v1440 = vpack.c.b16 %v1428, %v1427
        %v1454 = vsel %vm443, %v1368, 0
        %v1457 = vsel %vm443, %v1369, 0
        %1459 = vmatpush.bf16.msra.mxu0 %v1436
        %1460 = vmatpush.bf16.msra.mxu0 %v1435
        %1461 = vmatpush.bf16.msra.mxu0 %v1434
        %1462 = vmatpush.bf16.msra.mxu0 %v1433
        %1463 = vmatpush.bf16.msra.mxu0 %v1432
        %1464 = vmatpush.bf16.msra.mxu0 %v1431
        %1465 = vmatpush.bf16.msra.mxu0 %v1430
        %1466 = vmatpush.bf16.msra.mxu0 %v1429
        %1467 = vmatmul.bf16.gmra.mxu0 %v1372
        %v1468 = vpop.f32.mrf.mxu0
        %v1469 = vadd.f32 %v1379, %v1468
        %v1470 = vpop.f32.mrf.mxu0
        %v1471 = vadd.f32 %v1379, %v1470
        %1472 = vmatmul.bf16.gmra.mxu0 %v1376
        %v1473 = vpop.f32.mrf.mxu0
        %v1474 = vadd.f32 %v1379, %v1473
        %v1475 = vpop.f32.mrf.mxu0
        %v1476 = vadd.f32 %v1379, %v1475
        %1477 = vdwg.mxu0
        %1478 = vmatpush.bf16.msra.mxu0 0
        %1479 = vmatpush.bf16.msra.mxu0 0
        %1480 = vmatpush.bf16.msra.mxu0 0
        %1481 = vmatpush.bf16.msra.mxu0 0
        %1482 = vmatpush.bf16.msra.mxu0 %v1440
        %1483 = vmatpush.bf16.msra.mxu0 %v1439
        %1484 = vmatpush.bf16.msra.mxu0 %v1438
        %1485 = vmatpush.bf16.msra.mxu0 %v1437
        %1486 = vmatmul.bf16.gmra.mxu0 %v1454
        %v1487 = vpop.f32.mrf.mxu0
        %v1488 = vadd.f32 %v1469, %v1487
        %v1489 = vpop.f32.mrf.mxu0
        %v1490 = vadd.f32 %v1471, %v1489
        %1491 = vmatmul.bf16.gmra.mxu0 %v1457
        %v1492 = vpop.f32.mrf.mxu0
        %v1493 = vadd.f32 %v1474, %v1492
        %v1494 = vpop.f32.mrf.mxu0
        %v1495 = vadd.f32 %v1476, %v1494
        %1496 = vdwg.mxu0
        %v1497 = vmax.f32 %v1488, 0.0
        %v1498 = vmax.f32 %v1490, 0.0
        %v1499 = vmax.f32 %v1493, 0.0
        %v1500 = vmax.f32 %v1495, 0.0
        %v1501 = vadd.f32 %v1497, %v919
        %v1502 = vadd.f32 %v1498, %v920
        %v1503 = vadd.f32 %v1499, %v921
        %v1504 = vadd.f32 %v1500, %v922
        %s1505 = scalar_lea.vmem %s1, 192
        %v1506 = vld [vmem:[%s1505] sm:$0xf]
        %v1507 = vld [vmem:[%s1505 + $0x4] sm:$0xf]
        %v1508 = vld [vmem:[%s1505 + $0x8] sm:$0xf]
        %v1509 = vld [vmem:[%s1505 + $0xc] sm:$0xf]
        %v1510 = vld [vmem:[%s1505 + $0x10] sm:$0xf]
        %v1511 = vld [vmem:[%s1505 + $0x14] sm:$0xf]
        %v1512 = vld [vmem:[%s1505 + $0x18] sm:$0xf]
        %v1513 = vld [vmem:[%s1505 + $0x1c] sm:$0xf]
        %v1514 = vld [vmem:[%s1505 + $0x20] sm:$0xf]
        %v1515 = vld [vmem:[%s1505 + $0x24] sm:$0xf]
        %v1516 = vld [vmem:[%s1505 + $0x28] sm:$0xf]
        %v1517 = vld [vmem:[%s1505 + $0x2c] sm:$0xf]
        %v1518 = vld [vmem:[%s1505 + $0x30] sm:$0xf]
        %v1519 = vld [vmem:[%s1505 + $0x34] sm:$0xf]
        %v1520 = vld [vmem:[%s1505 + $0x38] sm:$0xf]
        %v1521 = vld [vmem:[%s1505 + $0x3c] sm:$0xf]
        %v1522 = vld [vmem:[%s1505 + $0x40] sm:$0xf]
        %v1523 = vld [vmem:[%s1505 + $0x44] sm:$0xf]
        %v1524 = vld [vmem:[%s1505 + $0x48] sm:$0xf]
        %v1525 = vld [vmem:[%s1505 + $0x4c] sm:$0xf]
        %v1526 = vld [vmem:[%s1505 + $0x50] sm:$0xf]
        %v1527 = vld [vmem:[%s1505 + $0x54] sm:$0xf]
        %v1528 = vld [vmem:[%s1505 + $0x58] sm:$0xf]
        %v1529 = vld [vmem:[%s1505 + $0x5c] sm:$0xf]
        %s1530 = scalar_lea.vmem %s2, 2
        %v1531 = vld [vmem:[%s1530] sm:$0x1]
        %v1532 = vpack.c.bf16 %v1501, %v1501
        %v1533 = vpack.c.bf16 %v1502, %v1502
        %v1534 = vpack.c.bf16 %v1503, %v1503
        %v1535 = vpack.c.bf16 %v1504, %v1504
        %v1536 = vrot.slane %v1501, 7
        %v1537 = vrot.slane %v1502, 7
        %v1538 = vrot.slane %v1503, 7
        %v1539 = vrot.slane %v1504, 7
        %v1540 = vsel %vm379, %v1538, %v1539
        %v1541 = vsel %vm379, %v1537, %v1538
        %v1542 = vsel %vm379, %v1536, %v1537
        %v1543 = vsel %vm379, %v1539, %v1536
        %v1544 = vsel %vm334, %v1540, 0.0
        %v1545 = vsel %vm335, %v1543, 0.0
        %v1546 = vsel %vm336, %v1542, 0.0
        %v1547 = vsel %vm337, %v1541, 0.0
        %v1548 = vpack.c.bf16 %v1544, %v1544
        %v1549 = vpack.c.bf16 %v1545, %v1545
        %v1550 = vpack.c.bf16 %v1546, %v1546
        %v1551 = vpack.c.bf16 %v1547, %v1547
        %v1552 = vrot.slane %v1501, 1
        %v1553 = vrot.slane %v1502, 1
        %v1554 = vrot.slane %v1503, 1
        %v1555 = vrot.slane %v1504, 1
        %v1556 = vsel %vm396, %v1554, %v1555
        %v1557 = vsel %vm396, %v1553, %v1554
        %v1558 = vsel %vm396, %v1552, %v1553
        %v1559 = vsel %vm396, %v1555, %v1552
        %v1560 = vsel %vm338, %v1557, 0.0
        %v1561 = vsel %vm339, %v1556, 0.0
        %v1562 = vsel %vm340, %v1559, 0.0
        %v1563 = vsel %vm341, %v1558, 0.0
        %v1564 = vpack.c.bf16 %v1560, %v1560
        %v1565 = vpack.c.bf16 %v1561, %v1561
        %v1566 = vpack.c.bf16 %v1562, %v1562
        %v1567 = vpack.c.bf16 %v1563, %v1563
        %v1572 = vunpack.c.l.b16 %v1548
        %v1573 = vunpack.c.l.b16 %v1549
        %v1574 = vunpack.c.l.b16 %v1550
        %v1575 = vunpack.c.l.b16 %v1551
        %v1576 = vpack.c.b16 %v1573, %v1572
        %v1577 = vpack.c.b16 %v1575, %v1574
        %v1582 = vunpack.c.l.b16 %v1532
        %v1583 = vunpack.c.l.b16 %v1533
        %v1584 = vunpack.c.l.b16 %v1534
        %v1585 = vunpack.c.l.b16 %v1535
        %v1586 = vpack.c.b16 %v1583, %v1582
        %v1587 = vpack.c.b16 %v1585, %v1584
        %1588 = vrot.lane.b32.xlu0 %v1586, 64
        %v1589 = vpop.permute.xlu0 %1588
        %1590 = vrot.lane.b32.xlu0 %v1587, 64
        %v1591 = vpop.permute.xlu0 %1590
        %v1596 = vunpack.c.l.b16 %v1564
        %v1597 = vunpack.c.l.b16 %v1565
        %v1598 = vunpack.c.l.b16 %v1566
        %v1599 = vunpack.c.l.b16 %v1567
        %v1600 = vpack.c.b16 %v1597, %v1596
        %v1601 = vpack.c.b16 %v1599, %v1598
        %v1604 = vsel %vm443, %v1576, %v1589
        %v1608 = vsel %vm443, %v1577, %v1591
        %v1611 = vperm.slane %v1531, 0
        %v1637 = vunpack.c.l.b16 %v1506
        %v1638 = vunpack.c.l.b16 %v1507
        %v1639 = vunpack.c.l.b16 %v1508
        %v1640 = vunpack.c.l.b16 %v1509
        %v1641 = vunpack.c.l.b16 %v1510
        %v1642 = vunpack.c.l.b16 %v1511
        %v1643 = vunpack.c.l.b16 %v1512
        %v1644 = vunpack.c.l.b16 %v1513
        %v1645 = vunpack.c.l.b16 %v1514
        %v1646 = vunpack.c.l.b16 %v1515
        %v1647 = vunpack.c.l.b16 %v1516
        %v1648 = vunpack.c.l.b16 %v1517
        %v1649 = vunpack.c.l.b16 %v1518
        %v1650 = vunpack.c.l.b16 %v1519
        %v1651 = vunpack.c.l.b16 %v1520
        %v1652 = vunpack.c.l.b16 %v1521
        %v1653 = vunpack.c.l.b16 %v1522
        %v1654 = vunpack.c.l.b16 %v1523
        %v1655 = vunpack.c.l.b16 %v1524
        %v1656 = vunpack.c.l.b16 %v1525
        %v1657 = vunpack.c.l.b16 %v1526
        %v1658 = vunpack.c.l.b16 %v1527
        %v1659 = vunpack.c.l.b16 %v1528
        %v1660 = vunpack.c.l.b16 %v1529
        %v1661 = vpack.c.b16 %v1638, %v1637
        %v1662 = vpack.c.b16 %v1640, %v1639
        %v1663 = vpack.c.b16 %v1642, %v1641
        %v1664 = vpack.c.b16 %v1644, %v1643
        %v1665 = vpack.c.b16 %v1646, %v1645
        %v1666 = vpack.c.b16 %v1648, %v1647
        %v1667 = vpack.c.b16 %v1650, %v1649
        %v1668 = vpack.c.b16 %v1652, %v1651
        %v1669 = vpack.c.b16 %v1654, %v1653
        %v1670 = vpack.c.b16 %v1656, %v1655
        %v1671 = vpack.c.b16 %v1658, %v1657
        %v1672 = vpack.c.b16 %v1660, %v1659
        %v1686 = vsel %vm443, %v1600, 0
        %v1689 = vsel %vm443, %v1601, 0
        %1691 = vmatpush.bf16.msra.mxu0 %v1668
        %1692 = vmatpush.bf16.msra.mxu0 %v1667
        %1693 = vmatpush.bf16.msra.mxu0 %v1666
        %1694 = vmatpush.bf16.msra.mxu0 %v1665
        %1695 = vmatpush.bf16.msra.mxu0 %v1664
        %1696 = vmatpush.bf16.msra.mxu0 %v1663
        %1697 = vmatpush.bf16.msra.mxu0 %v1662
        %1698 = vmatpush.bf16.msra.mxu0 %v1661
        %1699 = vmatmul.bf16.gmra.mxu0 %v1604
        %v1700 = vpop.f32.mrf.mxu0
        %v1701 = vadd.f32 %v1611, %v1700
        %v1702 = vpop.f32.mrf.mxu0
        %v1703 = vadd.f32 %v1611, %v1702
        %1704 = vmatmul.bf16.gmra.mxu0 %v1608
        %v1705 = vpop.f32.mrf.mxu0
        %v1706 = vadd.f32 %v1611, %v1705
        %v1707 = vpop.f32.mrf.mxu0
        %v1708 = vadd.f32 %v1611, %v1707
        %1709 = vdwg.mxu0
        %1710 = vmatpush.bf16.msra.mxu0 0
        %1711 = vmatpush.bf16.msra.mxu0 0
        %1712 = vmatpush.bf16.msra.mxu0 0
        %1713 = vmatpush.bf16.msra.mxu0 0
        %1714 = vmatpush.bf16.msra.mxu0 %v1672
        %1715 = vmatpush.bf16.msra.mxu0 %v1671
        %1716 = vmatpush.bf16.msra.mxu0 %v1670
        %1717 = vmatpush.bf16.msra.mxu0 %v1669
        %1718 = vmatmul.bf16.gmra.mxu0 %v1686
        %v1719 = vpop.f32.mrf.mxu0
        %v1720 = vadd.f32 %v1701, %v1719
        %v1721 = vpop.f32.mrf.mxu0
        %v1722 = vadd.f32 %v1703, %v1721
        %1723 = vmatmul.bf16.gmra.mxu0 %v1689
        %v1724 = vpop.f32.mrf.mxu0
        %v1725 = vadd.f32 %v1706, %v1724
        %v1726 = vpop.f32.mrf.mxu0
        %v1727 = vadd.f32 %v1708, %v1726
        %1728 = vdwg.mxu0
        %v1729 = vmax.f32 %v1720, 0.0
        %v1730 = vmax.f32 %v1722, 0.0
        %v1731 = vmax.f32 %v1725, 0.0
        %v1732 = vmax.f32 %v1727, 0.0
        %s1733 = scalar_lea.vmem %s3, 2
        %v1734 = vld [vmem:[%s1733] sm:$0x1]
        %s1735 = scalar_lea.vmem %s4, 2
        %v1736 = vld [vmem:[%s1735] sm:$0x1]
        %v1737 = vsel %vm443, %v1729, 0.0
        %v1738 = vsel %vm443, %v1730, 0.0
        %v1739 = vadd.f32 %v1737, %v1738
        %v1740 = vsel %vm443, %v1731, 0.0
        %v1741 = vadd.f32 %v1739, %v1740
        %v1742 = vsel %vm443, %v1732, 0.0
        %v1743 = vadd.f32 %v1741, %v1742
        %v1744 = vrot.slane %v1743, 4
        %v1745 = vadd.f32 %v1743, %v1744
        %v1746 = vrot.slane %v1745, 2
        %v1747 = vadd.f32 %v1745, %v1746
        %v1748 = vrot.slane %v1747, 1
        %v1749 = vadd.f32 %v1747, %v1748
        %v1750 = vmul.f32 %v1729, %v1729
        %v1751 = vmul.f32 %v1730, %v1730
        %v1752 = vmul.f32 %v1731, %v1731
        %v1753 = vmul.f32 %v1732, %v1732
        %v1754 = vsel %vm443, %v1750, 0.0
        %v1755 = vsel %vm443, %v1751, 0.0
        %v1756 = vadd.f32 %v1754, %v1755
        %v1757 = vsel %vm443, %v1752, 0.0
        %v1758 = vadd.f32 %v1756, %v1757
        %v1759 = vsel %vm443, %v1753, 0.0
        %v1760 = vadd.f32 %v1758, %v1759
        %v1761 = vrot.slane %v1760, 4
        %v1762 = vadd.f32 %v1760, %v1761
        %v1763 = vrot.slane %v1762, 2
        %v1764 = vadd.f32 %v1762, %v1763
        %v1765 = vrot.slane %v1764, 1
        %v1766 = vadd.f32 %v1764, %v1765
        %v1768 = vsel %vm443, %v1749, 0
        %1770 = vmatpush.msra.mxu0 0.0
        %1771 = vmatpush.msra.mxu0 0.0
        %1772 = vmatpush.msra.mxu0 0.0
        %1773 = vmatpush.msra.mxu0 0.0
        %1774 = vmatpush.msra.mxu0 0.0
        %1775 = vmatpush.msra.mxu0 0.0
        %1776 = vmatpush.msra.mxu0 0.0
        %1777 = vmatpush.msra.mxu0 0.0
        %1778 = vmatpush.msra.mxu0 %v312
        %1779 = vmatpush.msra.mxu0 %v311
        %1780 = vmatpush.msra.mxu0 %v310
        %1781 = vmatpush.msra.mxu0 %v309
        %1782 = vmatpush.msra.mxu0 %v308
        %1783 = vmatpush.msra.mxu0 %v307
        %1784 = vmatpush.msra.mxu0 %v306
        %1785 = vmatpush.msra.mxu0 %v305
        %1786 = vmatmul.f32.gmra.mxu0 %v1768
        %v1787 = vpop.f32.mrf.mxu0
        %v1788 = vadd.f32 0.0, %v1787
        %1789 = vdwg.mxu0
        %v1790 = vmul.f32 %v1788, 0.00390625
        %v1792 = vsel %vm443, %v1766, 0
        %1794 = vmatpush.msra.mxu0 0.0
        %1795 = vmatpush.msra.mxu0 0.0
        %1796 = vmatpush.msra.mxu0 0.0
        %1797 = vmatpush.msra.mxu0 0.0
        %1798 = vmatpush.msra.mxu0 0.0
        %1799 = vmatpush.msra.mxu0 0.0
        %1800 = vmatpush.msra.mxu0 0.0
        %1801 = vmatpush.msra.mxu0 0.0
        %1802 = vmatpush.msra.mxu0 %v312
        %1803 = vmatpush.msra.mxu0 %v311
        %1804 = vmatpush.msra.mxu0 %v310
        %1805 = vmatpush.msra.mxu0 %v309
        %1806 = vmatpush.msra.mxu0 %v308
        %1807 = vmatpush.msra.mxu0 %v307
        %1808 = vmatpush.msra.mxu0 %v306
        %1809 = vmatpush.msra.mxu0 %v305
        %1810 = vmatmul.f32.gmra.mxu0 %v1792
        %v1811 = vpop.f32.mrf.mxu0
        %v1812 = vadd.f32 0.0, %v1811
        %1813 = vdwg.mxu0
        %v1814 = vmul.f32 %v1812, 0.00390625
        %v1815 = vmul.f32 %v1790, %v1790
        %v1816 = vsub.f32 %v1814, %v1815
        %v1817 = vmax.f32 %v1816, 0.0
        %v1818 = vadd.f32 %v1817, 1e-05
        %v1819 = vrsqrt.pop %v1818
        %v1820 = vmul.f32 %v1819, %v1818
        %v1821 = vmul.f32 %v1820, %v1819
        %v1822 = vmul.f32 0.5, %v1821
        %v1823 = vsub.f32 1.5, %v1822
        %v1824 = vmul.f32 %v1819, %v1823
        %vm1825 = vweird.f32 %v1818
        %vm1826 = vweird.f32 %v1819
        %vm1827 = vmor %vm1825, %vm1826
        %v1828 = vsel %vm1827, %v1819, %v1824
        %v1829 = vperm.slane %v1790, 0
        %v1830 = vsub.f32 %v1729, %v1829
        %v1831 = vsub.f32 %v1730, %v1829
        %v1832 = vsub.f32 %v1731, %v1829
        %v1833 = vsub.f32 %v1732, %v1829
        %v1834 = vperm.slane %v1828, 0
        %v1835 = vmul.f32 %v1830, %v1834
        %v1836 = vmul.f32 %v1831, %v1834
        %v1837 = vmul.f32 %v1832, %v1834
        %v1838 = vmul.f32 %v1833, %v1834
        %v1840 = vperm.slane %v1734, 0
        %v1842 = vmul.f32 %v1835, %v1840
        %v1843 = vmul.f32 %v1836, %v1840
        %v1844 = vmul.f32 %v1837, %v1840
        %v1845 = vmul.f32 %v1838, %v1840
        %v1847 = vperm.slane %v1736, 0
        %v1849 = vadd.f32 %v1842, %v1847
        %v1850 = vadd.f32 %v1843, %v1847
        %v1851 = vadd.f32 %v1844, %v1847
        %v1852 = vadd.f32 %v1845, %v1847
        %s1853 = scalar_lea.vmem %s5, 192
        %v1854 = vld [vmem:[%s1853] sm:$0xf]
        %v1855 = vld [vmem:[%s1853 + $0x4] sm:$0xf]
        %v1856 = vld [vmem:[%s1853 + $0x8] sm:$0xf]
        %v1857 = vld [vmem:[%s1853 + $0xc] sm:$0xf]
        %v1858 = vld [vmem:[%s1853 + $0x10] sm:$0xf]
        %v1859 = vld [vmem:[%s1853 + $0x14] sm:$0xf]
        %v1860 = vld [vmem:[%s1853 + $0x18] sm:$0xf]
        %v1861 = vld [vmem:[%s1853 + $0x1c] sm:$0xf]
        %v1862 = vld [vmem:[%s1853 + $0x20] sm:$0xf]
        %v1863 = vld [vmem:[%s1853 + $0x24] sm:$0xf]
        %v1864 = vld [vmem:[%s1853 + $0x28] sm:$0xf]
        %v1865 = vld [vmem:[%s1853 + $0x2c] sm:$0xf]
        %v1866 = vld [vmem:[%s1853 + $0x30] sm:$0xf]
        %v1867 = vld [vmem:[%s1853 + $0x34] sm:$0xf]
        %v1868 = vld [vmem:[%s1853 + $0x38] sm:$0xf]
        %v1869 = vld [vmem:[%s1853 + $0x3c] sm:$0xf]
        %v1870 = vld [vmem:[%s1853 + $0x40] sm:$0xf]
        %v1871 = vld [vmem:[%s1853 + $0x44] sm:$0xf]
        %v1872 = vld [vmem:[%s1853 + $0x48] sm:$0xf]
        %v1873 = vld [vmem:[%s1853 + $0x4c] sm:$0xf]
        %v1874 = vld [vmem:[%s1853 + $0x50] sm:$0xf]
        %v1875 = vld [vmem:[%s1853 + $0x54] sm:$0xf]
        %v1876 = vld [vmem:[%s1853 + $0x58] sm:$0xf]
        %v1877 = vld [vmem:[%s1853 + $0x5c] sm:$0xf]
        %s1878 = scalar_lea.vmem %s6, 2
        %v1879 = vld [vmem:[%s1878] sm:$0x1]
        %v1880 = vpack.c.bf16 %v1849, %v1849
        %v1881 = vpack.c.bf16 %v1850, %v1850
        %v1882 = vpack.c.bf16 %v1851, %v1851
        %v1883 = vpack.c.bf16 %v1852, %v1852
        %v1884 = vrot.slane %v1849, 7
        %v1885 = vrot.slane %v1850, 7
        %v1886 = vrot.slane %v1851, 7
        %v1887 = vrot.slane %v1852, 7
        %v1888 = vsel %vm379, %v1886, %v1887
        %v1889 = vsel %vm379, %v1885, %v1886
        %v1890 = vsel %vm379, %v1884, %v1885
        %v1891 = vsel %vm379, %v1887, %v1884
        %v1892 = vsel %vm318, %v1891, 0.0
        %v1893 = vsel %vm319, %v1890, 0.0
        %v1894 = vsel %vm320, %v1889, 0.0
        %v1895 = vsel %vm321, %v1888, 0.0
        %v1896 = vpack.c.bf16 %v1892, %v1892
        %v1897 = vpack.c.bf16 %v1893, %v1893
        %v1898 = vpack.c.bf16 %v1894, %v1894
        %v1899 = vpack.c.bf16 %v1895, %v1895
        %v1900 = vrot.slane %v1849, 1
        %v1901 = vrot.slane %v1850, 1
        %v1902 = vrot.slane %v1851, 1
        %v1903 = vrot.slane %v1852, 1
        %v1904 = vsel %vm396, %v1902, %v1903
        %v1905 = vsel %vm396, %v1901, %v1902
        %v1906 = vsel %vm396, %v1900, %v1901
        %v1907 = vsel %vm396, %v1903, %v1900
        %v1908 = vsel %vm322, %v1906, 0.0
        %v1909 = vsel %vm323, %v1905, 0.0
        %v1910 = vsel %vm324, %v1904, 0.0
        %v1911 = vsel %vm325, %v1907, 0.0
        %v1912 = vpack.c.bf16 %v1908, %v1908
        %v1913 = vpack.c.bf16 %v1909, %v1909
        %v1914 = vpack.c.bf16 %v1910, %v1910
        %v1915 = vpack.c.bf16 %v1911, %v1911
        %v1920 = vunpack.c.l.b16 %v1896
        %v1921 = vunpack.c.l.b16 %v1897
        %v1922 = vunpack.c.l.b16 %v1898
        %v1923 = vunpack.c.l.b16 %v1899
        %v1924 = vpack.c.b16 %v1921, %v1920
        %v1925 = vpack.c.b16 %v1923, %v1922
        %v1930 = vunpack.c.l.b16 %v1880
        %v1931 = vunpack.c.l.b16 %v1881
        %v1932 = vunpack.c.l.b16 %v1882
        %v1933 = vunpack.c.l.b16 %v1883
        %v1934 = vpack.c.b16 %v1931, %v1930
        %v1935 = vpack.c.b16 %v1933, %v1932
        %1936 = vrot.lane.b32.xlu0 %v1934, 64
        %v1937 = vpop.permute.xlu0 %1936
        %1938 = vrot.lane.b32.xlu0 %v1935, 64
        %v1939 = vpop.permute.xlu0 %1938
        %v1944 = vunpack.c.l.b16 %v1912
        %v1945 = vunpack.c.l.b16 %v1913
        %v1946 = vunpack.c.l.b16 %v1914
        %v1947 = vunpack.c.l.b16 %v1915
        %v1948 = vpack.c.b16 %v1945, %v1944
        %v1949 = vpack.c.b16 %v1947, %v1946
        %v1952 = vsel %vm443, %v1924, %v1937
        %v1956 = vsel %vm443, %v1925, %v1939
        %v1959 = vperm.slane %v1879, 0
        %v1985 = vunpack.c.l.b16 %v1854
        %v1986 = vunpack.c.l.b16 %v1855
        %v1987 = vunpack.c.l.b16 %v1856
        %v1988 = vunpack.c.l.b16 %v1857
        %v1989 = vunpack.c.l.b16 %v1858
        %v1990 = vunpack.c.l.b16 %v1859
        %v1991 = vunpack.c.l.b16 %v1860
        %v1992 = vunpack.c.l.b16 %v1861
        %v1993 = vunpack.c.l.b16 %v1862
        %v1994 = vunpack.c.l.b16 %v1863
        %v1995 = vunpack.c.l.b16 %v1864
        %v1996 = vunpack.c.l.b16 %v1865
        %v1997 = vunpack.c.l.b16 %v1866
        %v1998 = vunpack.c.l.b16 %v1867
        %v1999 = vunpack.c.l.b16 %v1868
        %v2000 = vunpack.c.l.b16 %v1869
        %v2001 = vunpack.c.l.b16 %v1870
        %v2002 = vunpack.c.l.b16 %v1871
        %v2003 = vunpack.c.l.b16 %v1872
        %v2004 = vunpack.c.l.b16 %v1873
        %v2005 = vunpack.c.l.b16 %v1874
        %v2006 = vunpack.c.l.b16 %v1875
        %v2007 = vunpack.c.l.b16 %v1876
        %v2008 = vunpack.c.l.b16 %v1877
        %v2009 = vpack.c.b16 %v1986, %v1985
        %v2010 = vpack.c.b16 %v1988, %v1987
        %v2011 = vpack.c.b16 %v1990, %v1989
        %v2012 = vpack.c.b16 %v1992, %v1991
        %v2013 = vpack.c.b16 %v1994, %v1993
        %v2014 = vpack.c.b16 %v1996, %v1995
        %v2015 = vpack.c.b16 %v1998, %v1997
        %v2016 = vpack.c.b16 %v2000, %v1999
        %v2017 = vpack.c.b16 %v2002, %v2001
        %v2018 = vpack.c.b16 %v2004, %v2003
        %v2019 = vpack.c.b16 %v2006, %v2005
        %v2020 = vpack.c.b16 %v2008, %v2007
        %v2034 = vsel %vm443, %v1948, 0
        %v2037 = vsel %vm443, %v1949, 0
        %2039 = vmatpush.bf16.msra.mxu0 %v2016
        %2040 = vmatpush.bf16.msra.mxu0 %v2015
        %2041 = vmatpush.bf16.msra.mxu0 %v2014
        %2042 = vmatpush.bf16.msra.mxu0 %v2013
        %2043 = vmatpush.bf16.msra.mxu0 %v2012
        %2044 = vmatpush.bf16.msra.mxu0 %v2011
        %2045 = vmatpush.bf16.msra.mxu0 %v2010
        %2046 = vmatpush.bf16.msra.mxu0 %v2009
        %2047 = vmatmul.bf16.gmra.mxu0 %v1952
        %v2048 = vpop.f32.mrf.mxu0
        %v2049 = vadd.f32 %v1959, %v2048
        %v2050 = vpop.f32.mrf.mxu0
        %v2051 = vadd.f32 %v1959, %v2050
        %2052 = vmatmul.bf16.gmra.mxu0 %v1956
        %v2053 = vpop.f32.mrf.mxu0
        %v2054 = vadd.f32 %v1959, %v2053
        %v2055 = vpop.f32.mrf.mxu0
        %v2056 = vadd.f32 %v1959, %v2055
        %2057 = vdwg.mxu0
        %2058 = vmatpush.bf16.msra.mxu0 0
        %2059 = vmatpush.bf16.msra.mxu0 0
        %2060 = vmatpush.bf16.msra.mxu0 0
        %2061 = vmatpush.bf16.msra.mxu0 0
        %2062 = vmatpush.bf16.msra.mxu0 %v2020
        %2063 = vmatpush.bf16.msra.mxu0 %v2019
        %2064 = vmatpush.bf16.msra.mxu0 %v2018
        %2065 = vmatpush.bf16.msra.mxu0 %v2017
        %2066 = vmatmul.bf16.gmra.mxu0 %v2034
        %v2067 = vpop.f32.mrf.mxu0
        %v2068 = vadd.f32 %v2049, %v2067
        %v2069 = vpop.f32.mrf.mxu0
        %v2070 = vadd.f32 %v2051, %v2069
        %2071 = vmatmul.bf16.gmra.mxu0 %v2037
        %v2072 = vpop.f32.mrf.mxu0
        %v2073 = vadd.f32 %v2054, %v2072
        %v2074 = vpop.f32.mrf.mxu0
        %v2075 = vadd.f32 %v2056, %v2074
        %2076 = vdwg.mxu0
        %v2077 = vmax.f32 %v2068, 0.0
        %v2078 = vmax.f32 %v2070, 0.0
        %v2079 = vmax.f32 %v2073, 0.0
        %v2080 = vmax.f32 %v2075, 0.0
        %v2081 = vadd.f32 %v2077, %v1501
        %v2082 = vadd.f32 %v2078, %v1502
        %v2083 = vadd.f32 %v2079, %v1503
        %v2084 = vadd.f32 %v2080, %v1504
        %2085 = vst.msk [vmem:[%s298] sm:$0xff] %vm443, %v2081
        %2086 = vst.msk [vmem:[%s298 + $0x8] sm:$0xff] %vm443, %v2082
        %2087 = vst.msk [vmem:[%s298 + $0x10] sm:$0xff] %vm443, %v2083
        %2088 = vst.msk [vmem:[%s298 + $0x18] sm:$0xff] %vm443, %v2084
        %s2089 = sand.u32 %s203, 1
        %s2090 = scalar_lea.sflag [#allocation3], %s2089
        %s2091 = sand.u32 %s203, 1
        %s2092 = smul.addr %s2091, 32
        %s2093 = scalar_lea.vmem [#allocation2], %s2092
        // Predicated region
        $region53: #{tpu_custom_call.1} parent=51 // pred_check
          %p2094 = pneg %p213
        $region54: #{tpu_custom_call.1} parent=51 // pred_check_branch
          %2096 = sbr.rel (%p2094) target = $region56
        $region55: #{tpu_custom_call.1} parent=51 // pred_region
          %2098 = vsyncadd %s2090, 0
          %s2099 = smul.addr %s22, 4
          %s2100 = smul.addr %s2099, 8
          %s2101 = scalar_lea.hbm %s8, %s2100
          %s2102 = sshll.u32 %s2093, 4
          %s2103 = int_to_ptr.vmem [resolvable:$true] %s2102
          %s2104 = sshll.u32 %s2101, 4
          %s2105 = int_to_ptr.hbm [resolvable:$true] %s2104
          %2110 = dma.vmem_to_hbm [thread:$0]  %s2103, 512, %s2105, %s2090, 128, 128, 8
        $region56: #{tpu_custom_call.1} parent=51 // pred_fallthru
          _
      $region52: #{tpu_custom_call.1} parent=5 // pred_fallthru
        _
      %p2111 = scmp.le.s32.totalorder 2, %s17
      // Predicated region
      $region57: #{tpu_custom_call.1} parent=5 // pred_check
        %p2112 = pneg %p2111
      $region58: #{tpu_custom_call.1} parent=5 // pred_check_branch
        %2114 = sbr.rel (%p2112) target = $region60
      $region59: #{tpu_custom_call.1} parent=5 // pred_region
        %s2115 = ssub.s32 %s17, 2
        // Predicated region
        $region61: #{tpu_custom_call.1} parent=59 // pred_check
          %p2116 = pneg %p219
        $region62: #{tpu_custom_call.1} parent=59 // pred_check_branch
          %2118 = sbr.rel (%p2116) target = $region64
        $region63: #{tpu_custom_call.1} parent=59 // pred_region
          %s2119 = sand.u32 %s204, 1
          %s2120 = scalar_lea.sflag [#allocation3], %s2119
          %s2121 = sand.u32 %s204, 1
          %s2122 = smul.addr %s2121, 32
          %s2123 = scalar_lea.vmem [#allocation2], %s2122
          %2125 = dma.done %s2120, 512
        $region64: #{tpu_custom_call.1} parent=59 // pred_fallthru
          _
      $region60: #{tpu_custom_call.1} parent=5 // pred_fallthru
        _
    $region6: #{tpu_custom_call.1} parent=1 // loop_footer
      %s21 = sadd.s32 1, %s17
    $region7: #{tpu_custom_call.1} parent=1 // loop_footer_branch
      %16 = sbr.rel target = $region3
    $region8: #{tpu_custom_call.1} parent=1 // loop_exit
      _
    %2126 = vsyncpa [#allocation3], 1
    %s2127 = scalar_lea.sflag [#allocation3], 1
    %2128 = vsyncpa %s2127, 1

</llo_original>
